<compile_context>
chip_gen: v6e
topology: v6e:2x2x1
jax: 0.10.0
libtpu: 0.0.40
codegen_flags: <defaults>
</compile_context>

<pallas_src>
import functools

import jax
import jax.numpy as jnp
from jax.experimental import pallas as pl
from jax.experimental.pallas import tpu as pltpu

_LANE = 128


def _round_up(n, m):
    return ((n + m - 1) // m) * m


def _lstm_tagger_kernel(x_ref, w_ih_ref, w_hh_ref, b_ref, h0_ref, c0_ref,
                        fc_w_ref, fc_b_ref, out_ref, *, seq_len, hp):
    """One block of records.

    x_ref   : (S, Bt, D)   time-major input block
    w_ih_ref: (D, 4*Hp)    input->gates, gate slots padded to 128 lanes
    w_hh_ref: (Hp, 4*Hp)   hidden->gates (zero-padded rows/cols)
    b_ref   : (1, 4*Hp)    b_ih + b_hh (padded)
    h0/c0   : (Bt, Hp)     initial state (lanes H..Hp are zero)
    fc_w_ref: (Hp, Hp)     column 0 holds fc_w[-1, :], rest zero
    fc_b_ref: (1, Hp)      element 0 holds fc_b[-1], rest zero
    out_ref : (Bt, 3*Hp)   packed [h_final | c_final | score_slab]
    """
    S = seq_len
    Hp = hp
    Bt = x_ref.shape[1]
    D = x_ref.shape[2]

    # Input projections for every timestep & record in one MXU matmul.
    x2d = x_ref[...].reshape(S * Bt, D)                       # (S*Bt, D)
    xw = jnp.dot(x2d, w_ih_ref[...],
                 preferred_element_type=jnp.float32) + b_ref[...]
    xw3 = xw.reshape(S, Bt, 4 * Hp)                           # (S, Bt, 4Hp)

    w_hh = w_hh_ref[...]
    h = h0_ref[...]                                           # (Bt, Hp)
    c = c0_ref[...]

    # Fully unrolled recurrence: all gate slices are static and 128-lane aligned.
    # Padded gate lanes stay exactly zero in h/c (zero weights/bias => g=0).
    for t in range(S):
        gates = xw3[t] + jnp.dot(h, w_hh,
                                 preferred_element_type=jnp.float32)  # (Bt, 4Hp)
        i = jax.nn.sigmoid(gates[:, 0 * Hp:1 * Hp])
        f = jax.nn.sigmoid(gates[:, 1 * Hp:2 * Hp])
        g = jnp.tanh(gates[:, 2 * Hp:3 * Hp])
        o = jax.nn.sigmoid(gates[:, 3 * Hp:4 * Hp])
        c = f * c + i * g
        h = o * jnp.tanh(c)

    # Only the last fc row / last bias element survive in the PyTorch forward.
    score_slab = jax.nn.sigmoid(
        jnp.dot(h, fc_w_ref[...], preferred_element_type=jnp.float32)
        + fc_b_ref[...])                                      # (Bt, Hp); col 0 is real

    # Lane-dense packed output: three 128-aligned unmasked stores.
    out_ref[:, 0 * Hp:1 * Hp] = h
    out_ref[:, 1 * Hp:2 * Hp] = c
    out_ref[:, 2 * Hp:3 * Hp] = score_slab


def prepare_params(params, hidden_dim):
    """One-time parameter preprocessing (transpose + lane padding)."""
    w_ih, w_hh, b_ih, b_hh, fc_w, fc_b = params
    H = hidden_dim
    Hp = _round_up(H, _LANE)

    def pad_gate_cols(w_t):  # (rows, 4H) -> (rows, 4Hp), each gate in its own 128-lane slot
        rows = w_t.shape[0]
        out = jnp.zeros((rows, 4 * Hp), jnp.float32)
        for k in range(4):
            out = out.at[:, k * Hp:k * Hp + H].set(w_t[:, k * H:(k + 1) * H])
        return out

    w_ih_t = pad_gate_cols(jnp.transpose(w_ih).astype(jnp.float32))          # (D, 4Hp)
    w_hh_t = jnp.zeros((Hp, 4 * Hp), jnp.float32).at[:H, :].set(
        pad_gate_cols(jnp.transpose(w_hh).astype(jnp.float32)))              # (Hp, 4Hp)
    b = pad_gate_cols((b_ih + b_hh).astype(jnp.float32).reshape(1, 4 * H))   # (1, 4Hp)

    fc_w_pad = jnp.zeros((Hp, Hp), jnp.float32).at[:H, 0].set(
        fc_w[-1, :].astype(jnp.float32))                                     # (Hp, Hp)
    fc_b_pad = jnp.zeros((1, Hp), jnp.float32).at[0, 0].set(
        fc_b[-1].astype(jnp.float32))                                        # (1, Hp)
    return (w_ih_t, w_hh_t, b, fc_w_pad, fc_b_pad)


@jax.jit
def lstm_tagger_forward_batched(records, h0, c0, prepared):
    """records: (B, S, D) f32; h0/c0: (B, H) per-record initial state.

    Returns (scores (B,), (h_n (B, H), c_n (B, H))).
    """
    w_ih_t, w_hh_t, b, fc_w_pad, fc_b_pad = prepared
    B, S, D = records.shape
    H = h0.shape[1]
    Hp = w_hh_t.shape[0]

    # Batch block: 8 records per grid point (sublane-aligned) when divisible,
    # otherwise the whole batch in one block (full-dim block is always legal).
    Bt = 8 if (B % 8 == 0) else B
    nb = B // Bt

    x_tm = jnp.transpose(records.astype(jnp.float32), (1, 0, 2))   # (S, B, D)
    h0p = jnp.zeros((B, Hp), jnp.float32).at[:, :H].set(h0.astype(jnp.float32))
    c0p = jnp.zeros((B, Hp), jnp.float32).at[:, :H].set(c0.astype(jnp.float32))

    kernel = functools.partial(_lstm_tagger_kernel, seq_len=S, hp=Hp)

    out = pl.pallas_call(
        kernel,
        out_shape=jax.ShapeDtypeStruct((B, 3 * Hp), jnp.float32),
        grid_spec=pltpu.PrefetchScalarGridSpec(
            num_scalar_prefetch=0,
            grid=(nb,),
            in_specs=[
                pl.BlockSpec((S, Bt, D), lambda i: (0, i, 0)),      # x (time-major)
                pl.BlockSpec((D, 4 * Hp), lambda i: (0, 0)),        # w_ih_t
                pl.BlockSpec((Hp, 4 * Hp), lambda i: (0, 0)),       # w_hh_t
                pl.BlockSpec((1, 4 * Hp), lambda i: (0, 0)),        # bias
                pl.BlockSpec((Bt, Hp), lambda i: (i, 0)),           # h0
                pl.BlockSpec((Bt, Hp), lambda i: (i, 0)),           # c0
                pl.BlockSpec((Hp, Hp), lambda i: (0, 0)),           # fc last row (padded)
                pl.BlockSpec((1, Hp), lambda i: (0, 0)),            # fc last bias (padded)
            ],
            out_specs=pl.BlockSpec((Bt, 3 * Hp), lambda i: (i, 0)),
        ),
        compiler_params=pltpu.CompilerParams(
            dimension_semantics=("parallel",)),
    )(x_tm, w_ih_t, w_hh_t, b, h0p, c0p, fc_w_pad, fc_b_pad)

    scores = out[:, 2 * Hp]              # (B,)
    h_n = out[:, 0 * Hp:0 * Hp + H]      # (B, H)
    c_n = out[:, 1 * Hp:1 * Hp + H]      # (B, H)
    return scores, (h_n, c_n)


def lstm_tagger_forward(record, hidden, prepared):
    """Single-record API matching the PyTorch module.

    record: (seq_len, input_dim); hidden: (h0, c0) each (n_layers=1, 1, H).
    Returns (tag_scores (1,), (h_n (1,1,H), c_n (1,1,H))).
    """
    h0, c0 = hidden
    H = h0.shape[-1]
    scores, (h_n, c_n) = lstm_tagger_forward_batched(
        record[None, ...], h0.reshape(1, H), c0.reshape(1, H), prepared)
    return scores.reshape(1,), (h_n.reshape(1, 1, H), c_n.reshape(1, 1, H))


def init_params(key, input_dim, hidden_dim, tagset_size):
    """Deterministic synthetic parameters with the same shapes as nn.LSTM / nn.Linear."""
    ks = jax.random.split(key, 6)
    bound = 1.0 / jnp.sqrt(hidden_dim)
    w_ih = jax.random.uniform(ks[0], (4 * hidden_dim, input_dim), jnp.float32, -bound, bound)
    w_hh = jax.random.uniform(ks[1], (4 * hidden_dim, hidden_dim), jnp.float32, -bound, bound)
    b_ih = jax.random.uniform(ks[2], (4 * hidden_dim,), jnp.float32, -bound, bound)
    b_hh = jax.random.uniform(ks[3], (4 * hidden_dim,), jnp.float32, -bound, bound)
    fc_w = jax.random.uniform(ks[4], (tagset_size, hidden_dim), jnp.float32, -bound, bound)
    fc_b = jax.random.uniform(ks[5], (tagset_size,), jnp.float32, -bound, bound)
    return (w_ih, w_hh, b_ih, b_hh, fc_w, fc_b)


def init_hidden(hidden_dim, n_layers=1):
    return (jnp.zeros((n_layers, 1, hidden_dim), jnp.float32),
            jnp.zeros((n_layers, 1, hidden_dim), jnp.float32))


def _reference(records, h0, c0, params):
    """Pure-JAX reference matching the PyTorch forward, vmapped over records."""
    w_ih, w_hh, b_ih, b_hh, fc_w, fc_b = params
    H = h0.shape[-1]

    def one(x, h, c):
        def step(carry, xt):
            h, c = carry
            gates = xt @ w_ih.T + b_ih + h @ w_hh.T + b_hh
            i = jax.nn.sigmoid(gates[:H])
            f = jax.nn.sigmoid(gates[H:2 * H])
            g = jnp.tanh(gates[2 * H:3 * H])
            o = jax.nn.sigmoid(gates[3 * H:])
            c = f * c + i * g
            h = o * jnp.tanh(c)
            return (h, c), None

        (h, c), _ = jax.lax.scan(step, (h, c), x)
        score = jax.nn.sigmoid(h @ fc_w.T + fc_b)[-1]
        return score, h, c

    return jax.vmap(one)(records, h0, c0)


if __name__ == "__main__":
    input_dim, hidden_dim, tagset_size, seq_len = 16, 32, 4, 8
    batch = 16

    key = jax.random.PRNGKey(0)
    k_data, k_param = jax.random.split(key)
    records = jax.random.normal(k_data, (batch, seq_len, input_dim), jnp.float32)
    params = init_params(k_param, input_dim, hidden_dim, tagset_size)
    prepared = prepare_params(params, hidden_dim)

    h0 = jnp.zeros((batch, hidden_dim), jnp.float32)
    c0 = jnp.zeros((batch, hidden_dim), jnp.float32)

    # Batched path (main throughput path: parallel grid over record blocks).
    scores, (h_n, c_n) = lstm_tagger_forward_batched(records, h0, c0, prepared)
    jax.block_until_ready((scores, h_n, c_n))

    # Single-record path matching the PyTorch module signature.
    tag_scores, (h1, c1) = lstm_tagger_forward(records[0], init_hidden(hidden_dim), prepared)
    jax.block_until_ready((tag_scores, h1, c1))

    # Correctness vs pure-JAX reference.
    ref_s, ref_h, ref_c = _reference(records, h0, c0, params)
    assert jnp.allclose(scores, ref_s, atol=2e-4, rtol=2e-4)
    assert jnp.allclose(h_n, ref_h, atol=2e-4, rtol=2e-4)
    assert jnp.allclose(c_n, ref_c, atol=2e-4, rtol=2e-4)
    assert jnp.allclose(tag_scores[0], ref_s[0], atol=2e-4, rtol=2e-4)
    assert tag_scores.shape == (1,)
    assert h1.shape == (1, 1, hidden_dim) and c1.shape == (1, 1, hidden_dim)
    print("KERNEL_OK")
</pallas_src>

<mosaic_0001>
module attributes {stable_mosaic.version = 11 : i64} {
  func.func @_lstm_tagger_kernel(%arg0: i32, %arg1: memref<8x8x16xf32, #tpu.memory_space<vmem>>, %arg2: memref<16x512xf32, #tpu.memory_space<vmem>>, %arg3: memref<128x512xf32, #tpu.memory_space<vmem>>, %arg4: memref<1x512xf32, #tpu.memory_space<vmem>>, %arg5: memref<8x128xf32, #tpu.memory_space<vmem>>, %arg6: memref<8x128xf32, #tpu.memory_space<vmem>>, %arg7: memref<128x128xf32, #tpu.memory_space<vmem>>, %arg8: memref<1x128xf32, #tpu.memory_space<vmem>>, %arg9: memref<8x384xf32, #tpu.memory_space<vmem>>) attributes {dimension_semantics = [#tpu.dimension_semantics<parallel>], iteration_bounds = array<i64: 2>, scalar_prefetch = 0 : i64, scratch_operands = 0 : i64, tpu.core_type = #tpu.core_type<tc>, window_params = [{transform_indices = @transform_0, window_bounds = array<i64: 8, 8, 16>}, {pipeline_mode = #tpu.pipeline_mode<synchronous>, transform_indices = @transform_1, window_bounds = array<i64: 16, 512>}, {pipeline_mode = #tpu.pipeline_mode<synchronous>, transform_indices = @transform_2, window_bounds = array<i64: 128, 512>}, {pipeline_mode = #tpu.pipeline_mode<synchronous>, transform_indices = @transform_3, window_bounds = array<i64: 1, 512>}, {transform_indices = @transform_4, window_bounds = array<i64: 8, 128>}, {transform_indices = @transform_5, window_bounds = array<i64: 8, 128>}, {pipeline_mode = #tpu.pipeline_mode<synchronous>, transform_indices = @transform_6, window_bounds = array<i64: 128, 128>}, {pipeline_mode = #tpu.pipeline_mode<synchronous>, transform_indices = @transform_7, window_bounds = array<i64: 1, 128>}, {transform_indices = @transform_8, window_bounds = array<i64: 8, 384>}]} {
    %c0 = arith.constant 0 : index
    %c0_0 = arith.constant 0 : index
    %c0_1 = arith.constant 0 : index
    %0 = vector.load %arg1[%c0, %c0_0, %c0_1] : memref<8x8x16xf32, #tpu.memory_space<vmem>>, vector<8x8x16xf32>
    %1 = vector.shape_cast %0 : vector<8x8x16xf32> to vector<64x16xf32>
    %c0_2 = arith.constant 0 : index
    %c0_3 = arith.constant 0 : index
    %2 = vector.load %arg2[%c0_2, %c0_3] : memref<16x512xf32, #tpu.memory_space<vmem>>, vector<16x512xf32>
    %cst = arith.constant dense<0.000000e+00> : vector<64x512xf32>
    %3 = tpu.matmul %1, %2, %cst {dimension_numbers = #tpu.dot_dimension_numbers<[1], [0], [0], [1], [0, 0, 1, 1], [], []>} : vector<64x16xf32>, vector<16x512xf32>, vector<64x512xf32> -> vector<64x512xf32>
    %c0_4 = arith.constant 0 : index
    %c0_5 = arith.constant 0 : index
    %4 = vector.load %arg4[%c0_4, %c0_5] : memref<1x512xf32, #tpu.memory_space<vmem>>, vector<1x512xf32>
    %5 = vector.broadcast %4 : vector<1x512xf32> to vector<64x512xf32>
    %6 = arith.addf %3, %5 : vector<64x512xf32>
    %7 = vector.shape_cast %6 : vector<64x512xf32> to vector<8x8x512xf32>
    %c0_6 = arith.constant 0 : index
    %c0_7 = arith.constant 0 : index
    %8 = vector.load %arg3[%c0_6, %c0_7] : memref<128x512xf32, #tpu.memory_space<vmem>>, vector<128x512xf32>
    %c0_8 = arith.constant 0 : index
    %c0_9 = arith.constant 0 : index
    %9 = vector.load %arg5[%c0_8, %c0_9] : memref<8x128xf32, #tpu.memory_space<vmem>>, vector<8x128xf32>
    %c0_10 = arith.constant 0 : index
    %c0_11 = arith.constant 0 : index
    %10 = vector.load %arg6[%c0_10, %c0_11] : memref<8x128xf32, #tpu.memory_space<vmem>>, vector<8x128xf32>
    %11 = vector.extract_strided_slice %7 {offsets = [0, 0, 0], sizes = [1, 8, 512], strides = [1, 1, 1]} : vector<8x8x512xf32> to vector<1x8x512xf32>
    %12 = vector.shape_cast %11 : vector<1x8x512xf32> to vector<8x512xf32>
    %cst_12 = arith.constant dense<0.000000e+00> : vector<8x512xf32>
    %13 = tpu.matmul %9, %8, %cst_12 {dimension_numbers = #tpu.dot_dimension_numbers<[1], [0], [0], [1], [0, 0, 1, 1], [], []>} : vector<8x128xf32>, vector<128x512xf32>, vector<8x512xf32> -> vector<8x512xf32>
    %14 = arith.addf %12, %13 : vector<8x512xf32>
    %15 = vector.extract_strided_slice %14 {offsets = [0, 0], sizes = [8, 128], strides = [1, 1]} : vector<8x512xf32> to vector<8x128xf32>
    %16 = arith.negf %15 : vector<8x128xf32>
    %17 = math.exp %16 : vector<8x128xf32>
    %cst_13 = arith.constant 1.000000e+00 : f32
    %18 = vector.broadcast %cst_13 : f32 to vector<8x128xf32>
    %19 = arith.addf %18, %17 : vector<8x128xf32>
    %20 = arith.divf %18, %19 : vector<8x128xf32>
    %21 = vector.extract_strided_slice %14 {offsets = [0, 128], sizes = [8, 128], strides = [1, 1]} : vector<8x512xf32> to vector<8x128xf32>
    %22 = arith.negf %21 : vector<8x128xf32>
    %23 = math.exp %22 : vector<8x128xf32>
    %cst_14 = arith.constant 1.000000e+00 : f32
    %24 = vector.broadcast %cst_14 : f32 to vector<8x128xf32>
    %25 = arith.addf %24, %23 : vector<8x128xf32>
    %26 = arith.divf %24, %25 : vector<8x128xf32>
    %27 = vector.extract_strided_slice %14 {offsets = [0, 256], sizes = [8, 128], strides = [1, 1]} : vector<8x512xf32> to vector<8x128xf32>
    %28 = math.tanh %27 : vector<8x128xf32>
    %29 = vector.extract_strided_slice %14 {offsets = [0, 384], sizes = [8, 128], strides = [1, 1]} : vector<8x512xf32> to vector<8x128xf32>
    %30 = arith.negf %29 : vector<8x128xf32>
    %31 = math.exp %30 : vector<8x128xf32>
    %cst_15 = arith.constant 1.000000e+00 : f32
    %32 = vector.broadcast %cst_15 : f32 to vector<8x128xf32>
    %33 = arith.addf %32, %31 : vector<8x128xf32>
    %34 = arith.divf %32, %33 : vector<8x128xf32>
    %35 = arith.mulf %26, %10 : vector<8x128xf32>
    %36 = arith.mulf %20, %28 : vector<8x128xf32>
    %37 = arith.addf %35, %36 : vector<8x128xf32>
    %38 = math.tanh %37 : vector<8x128xf32>
    %39 = arith.mulf %34, %38 : vector<8x128xf32>
    %40 = vector.extract_strided_slice %7 {offsets = [1, 0, 0], sizes = [1, 8, 512], strides = [1, 1, 1]} : vector<8x8x512xf32> to vector<1x8x512xf32>
    %41 = vector.shape_cast %40 : vector<1x8x512xf32> to vector<8x512xf32>
    %cst_16 = arith.constant dense<0.000000e+00> : vector<8x512xf32>
    %42 = tpu.matmul %39, %8, %cst_16 {dimension_numbers = #tpu.dot_dimension_numbers<[1], [0], [0], [1], [0, 0, 1, 1], [], []>} : vector<8x128xf32>, vector<128x512xf32>, vector<8x512xf32> -> vector<8x512xf32>
    %43 = arith.addf %41, %42 : vector<8x512xf32>
    %44 = vector.extract_strided_slice %43 {offsets = [0, 0], sizes = [8, 128], strides = [1, 1]} : vector<8x512xf32> to vector<8x128xf32>
    %45 = arith.negf %44 : vector<8x128xf32>
    %46 = math.exp %45 : vector<8x128xf32>
    %cst_17 = arith.constant 1.000000e+00 : f32
    %47 = vector.broadcast %cst_17 : f32 to vector<8x128xf32>
    %48 = arith.addf %47, %46 : vector<8x128xf32>
    %49 = arith.divf %47, %48 : vector<8x128xf32>
    %50 = vector.extract_strided_slice %43 {offsets = [0, 128], sizes = [8, 128], strides = [1, 1]} : vector<8x512xf32> to vector<8x128xf32>
    %51 = arith.negf %50 : vector<8x128xf32>
    %52 = math.exp %51 : vector<8x128xf32>
    %cst_18 = arith.constant 1.000000e+00 : f32
    %53 = vector.broadcast %cst_18 : f32 to vector<8x128xf32>
    %54 = arith.addf %53, %52 : vector<8x128xf32>
    %55 = arith.divf %53, %54 : vector<8x128xf32>
    %56 = vector.extract_strided_slice %43 {offsets = [0, 256], sizes = [8, 128], strides = [1, 1]} : vector<8x512xf32> to vector<8x128xf32>
    %57 = math.tanh %56 : vector<8x128xf32>
    %58 = vector.extract_strided_slice %43 {offsets = [0, 384], sizes = [8, 128], strides = [1, 1]} : vector<8x512xf32> to vector<8x128xf32>
    %59 = arith.negf %58 : vector<8x128xf32>
    %60 = math.exp %59 : vector<8x128xf32>
    %cst_19 = arith.constant 1.000000e+00 : f32
    %61 = vector.broadcast %cst_19 : f32 to vector<8x128xf32>
    %62 = arith.addf %61, %60 : vector<8x128xf32>
    %63 = arith.divf %61, %62 : vector<8x128xf32>
    %64 = arith.mulf %55, %37 : vector<8x128xf32>
    %65 = arith.mulf %49, %57 : vector<8x128xf32>
    %66 = arith.addf %64, %65 : vector<8x128xf32>
    %67 = math.tanh %66 : vector<8x128xf32>
    %68 = arith.mulf %63, %67 : vector<8x128xf32>
    %69 = vector.extract_strided_slice %7 {offsets = [2, 0, 0], sizes = [1, 8, 512], strides = [1, 1, 1]} : vector<8x8x512xf32> to vector<1x8x512xf32>
    %70 = vector.shape_cast %69 : vector<1x8x512xf32> to vector<8x512xf32>
    %cst_20 = arith.constant dense<0.000000e+00> : vector<8x512xf32>
    %71 = tpu.matmul %68, %8, %cst_20 {dimension_numbers = #tpu.dot_dimension_numbers<[1], [0], [0], [1], [0, 0, 1, 1], [], []>} : vector<8x128xf32>, vector<128x512xf32>, vector<8x512xf32> -> vector<8x512xf32>
    %72 = arith.addf %70, %71 : vector<8x512xf32>
    %73 = vector.extract_strided_slice %72 {offsets = [0, 0], sizes = [8, 128], strides = [1, 1]} : vector<8x512xf32> to vector<8x128xf32>
    %74 = arith.negf %73 : vector<8x128xf32>
    %75 = math.exp %74 : vector<8x128xf32>
    %cst_21 = arith.constant 1.000000e+00 : f32
    %76 = vector.broadcast %cst_21 : f32 to vector<8x128xf32>
    %77 = arith.addf %76, %75 : vector<8x128xf32>
    %78 = arith.divf %76, %77 : vector<8x128xf32>
    %79 = vector.extract_strided_slice %72 {offsets = [0, 128], sizes = [8, 128], strides = [1, 1]} : vector<8x512xf32> to vector<8x128xf32>
    %80 = arith.negf %79 : vector<8x128xf32>
    %81 = math.exp %80 : vector<8x128xf32>
    %cst_22 = arith.constant 1.000000e+00 : f32
    %82 = vector.broadcast %cst_22 : f32 to vector<8x128xf32>
    %83 = arith.addf %82, %81 : vector<8x128xf32>
    %84 = arith.divf %82, %83 : vector<8x128xf32>
    %85 = vector.extract_strided_slice %72 {offsets = [0, 256], sizes = [8, 128], strides = [1, 1]} : vector<8x512xf32> to vector<8x128xf32>
    %86 = math.tanh %85 : vector<8x128xf32>
    %87 = vector.extract_strided_slice %72 {offsets = [0, 384], sizes = [8, 128], strides = [1, 1]} : vector<8x512xf32> to vector<8x128xf32>
    %88 = arith.negf %87 : vector<8x128xf32>
    %89 = math.exp %88 : vector<8x128xf32>
    %cst_23 = arith.constant 1.000000e+00 : f32
    %90 = vector.broadcast %cst_23 : f32 to vector<8x128xf32>
    %91 = arith.addf %90, %89 : vector<8x128xf32>
    %92 = arith.divf %90, %91 : vector<8x128xf32>
    %93 = arith.mulf %84, %66 : vector<8x128xf32>
    %94 = arith.mulf %78, %86 : vector<8x128xf32>
    %95 = arith.addf %93, %94 : vector<8x128xf32>
    %96 = math.tanh %95 : vector<8x128xf32>
    %97 = arith.mulf %92, %96 : vector<8x128xf32>
    %98 = vector.extract_strided_slice %7 {offsets = [3, 0, 0], sizes = [1, 8, 512], strides = [1, 1, 1]} : vector<8x8x512xf32> to vector<1x8x512xf32>
    %99 = vector.shape_cast %98 : vector<1x8x512xf32> to vector<8x512xf32>
    %cst_24 = arith.constant dense<0.000000e+00> : vector<8x512xf32>
    %100 = tpu.matmul %97, %8, %cst_24 {dimension_numbers = #tpu.dot_dimension_numbers<[1], [0], [0], [1], [0, 0, 1, 1], [], []>} : vector<8x128xf32>, vector<128x512xf32>, vector<8x512xf32> -> vector<8x512xf32>
    %101 = arith.addf %99, %100 : vector<8x512xf32>
    %102 = vector.extract_strided_slice %101 {offsets = [0, 0], sizes = [8, 128], strides = [1, 1]} : vector<8x512xf32> to vector<8x128xf32>
    %103 = arith.negf %102 : vector<8x128xf32>
    %104 = math.exp %103 : vector<8x128xf32>
    %cst_25 = arith.constant 1.000000e+00 : f32
    %105 = vector.broadcast %cst_25 : f32 to vector<8x128xf32>
    %106 = arith.addf %105, %104 : vector<8x128xf32>
    %107 = arith.divf %105, %106 : vector<8x128xf32>
    %108 = vector.extract_strided_slice %101 {offsets = [0, 128], sizes = [8, 128], strides = [1, 1]} : vector<8x512xf32> to vector<8x128xf32>
    %109 = arith.negf %108 : vector<8x128xf32>
    %110 = math.exp %109 : vector<8x128xf32>
    %cst_26 = arith.constant 1.000000e+00 : f32
    %111 = vector.broadcast %cst_26 : f32 to vector<8x128xf32>
    %112 = arith.addf %111, %110 : vector<8x128xf32>
    %113 = arith.divf %111, %112 : vector<8x128xf32>
    %114 = vector.extract_strided_slice %101 {offsets = [0, 256], sizes = [8, 128], strides = [1, 1]} : vector<8x512xf32> to vector<8x128xf32>
    %115 = math.tanh %114 : vector<8x128xf32>
    %116 = vector.extract_strided_slice %101 {offsets = [0, 384], sizes = [8, 128], strides = [1, 1]} : vector<8x512xf32> to vector<8x128xf32>
    %117 = arith.negf %116 : vector<8x128xf32>
    %118 = math.exp %117 : vector<8x128xf32>
    %cst_27 = arith.constant 1.000000e+00 : f32
    %119 = vector.broadcast %cst_27 : f32 to vector<8x128xf32>
    %120 = arith.addf %119, %118 : vector<8x128xf32>
    %121 = arith.divf %119, %120 : vector<8x128xf32>
    %122 = arith.mulf %113, %95 : vector<8x128xf32>
    %123 = arith.mulf %107, %115 : vector<8x128xf32>
    %124 = arith.addf %122, %123 : vector<8x128xf32>
    %125 = math.tanh %124 : vector<8x128xf32>
    %126 = arith.mulf %121, %125 : vector<8x128xf32>
    %127 = vector.extract_strided_slice %7 {offsets = [4, 0, 0], sizes = [1, 8, 512], strides = [1, 1, 1]} : vector<8x8x512xf32> to vector<1x8x512xf32>
    %128 = vector.shape_cast %127 : vector<1x8x512xf32> to vector<8x512xf32>
    %cst_28 = arith.constant dense<0.000000e+00> : vector<8x512xf32>
    %129 = tpu.matmul %126, %8, %cst_28 {dimension_numbers = #tpu.dot_dimension_numbers<[1], [0], [0], [1], [0, 0, 1, 1], [], []>} : vector<8x128xf32>, vector<128x512xf32>, vector<8x512xf32> -> vector<8x512xf32>
    %130 = arith.addf %128, %129 : vector<8x512xf32>
    %131 = vector.extract_strided_slice %130 {offsets = [0, 0], sizes = [8, 128], strides = [1, 1]} : vector<8x512xf32> to vector<8x128xf32>
    %132 = arith.negf %131 : vector<8x128xf32>
    %133 = math.exp %132 : vector<8x128xf32>
    %cst_29 = arith.constant 1.000000e+00 : f32
    %134 = vector.broadcast %cst_29 : f32 to vector<8x128xf32>
    %135 = arith.addf %134, %133 : vector<8x128xf32>
    %136 = arith.divf %134, %135 : vector<8x128xf32>
    %137 = vector.extract_strided_slice %130 {offsets = [0, 128], sizes = [8, 128], strides = [1, 1]} : vector<8x512xf32> to vector<8x128xf32>
    %138 = arith.negf %137 : vector<8x128xf32>
    %139 = math.exp %138 : vector<8x128xf32>
    %cst_30 = arith.constant 1.000000e+00 : f32
    %140 = vector.broadcast %cst_30 : f32 to vector<8x128xf32>
    %141 = arith.addf %140, %139 : vector<8x128xf32>
    %142 = arith.divf %140, %141 : vector<8x128xf32>
    %143 = vector.extract_strided_slice %130 {offsets = [0, 256], sizes = [8, 128], strides = [1, 1]} : vector<8x512xf32> to vector<8x128xf32>
    %144 = math.tanh %143 : vector<8x128xf32>
    %145 = vector.extract_strided_slice %130 {offsets = [0, 384], sizes = [8, 128], strides = [1, 1]} : vector<8x512xf32> to vector<8x128xf32>
    %146 = arith.negf %145 : vector<8x128xf32>
    %147 = math.exp %146 : vector<8x128xf32>
    %cst_31 = arith.constant 1.000000e+00 : f32
    %148 = vector.broadcast %cst_31 : f32 to vector<8x128xf32>
    %149 = arith.addf %148, %147 : vector<8x128xf32>
    %150 = arith.divf %148, %149 : vector<8x128xf32>
    %151 = arith.mulf %142, %124 : vector<8x128xf32>
    %152 = arith.mulf %136, %144 : vector<8x128xf32>
    %153 = arith.addf %151, %152 : vector<8x128xf32>
    %154 = math.tanh %153 : vector<8x128xf32>
    %155 = arith.mulf %150, %154 : vector<8x128xf32>
    %156 = vector.extract_strided_slice %7 {offsets = [5, 0, 0], sizes = [1, 8, 512], strides = [1, 1, 1]} : vector<8x8x512xf32> to vector<1x8x512xf32>
    %157 = vector.shape_cast %156 : vector<1x8x512xf32> to vector<8x512xf32>
    %cst_32 = arith.constant dense<0.000000e+00> : vector<8x512xf32>
    %158 = tpu.matmul %155, %8, %cst_32 {dimension_numbers = #tpu.dot_dimension_numbers<[1], [0], [0], [1], [0, 0, 1, 1], [], []>} : vector<8x128xf32>, vector<128x512xf32>, vector<8x512xf32> -> vector<8x512xf32>
    %159 = arith.addf %157, %158 : vector<8x512xf32>
    %160 = vector.extract_strided_slice %159 {offsets = [0, 0], sizes = [8, 128], strides = [1, 1]} : vector<8x512xf32> to vector<8x128xf32>
    %161 = arith.negf %160 : vector<8x128xf32>
    %162 = math.exp %161 : vector<8x128xf32>
    %cst_33 = arith.constant 1.000000e+00 : f32
    %163 = vector.broadcast %cst_33 : f32 to vector<8x128xf32>
    %164 = arith.addf %163, %162 : vector<8x128xf32>
    %165 = arith.divf %163, %164 : vector<8x128xf32>
    %166 = vector.extract_strided_slice %159 {offsets = [0, 128], sizes = [8, 128], strides = [1, 1]} : vector<8x512xf32> to vector<8x128xf32>
    %167 = arith.negf %166 : vector<8x128xf32>
    %168 = math.exp %167 : vector<8x128xf32>
    %cst_34 = arith.constant 1.000000e+00 : f32
    %169 = vector.broadcast %cst_34 : f32 to vector<8x128xf32>
    %170 = arith.addf %169, %168 : vector<8x128xf32>
    %171 = arith.divf %169, %170 : vector<8x128xf32>
    %172 = vector.extract_strided_slice %159 {offsets = [0, 256], sizes = [8, 128], strides = [1, 1]} : vector<8x512xf32> to vector<8x128xf32>
    %173 = math.tanh %172 : vector<8x128xf32>
    %174 = vector.extract_strided_slice %159 {offsets = [0, 384], sizes = [8, 128], strides = [1, 1]} : vector<8x512xf32> to vector<8x128xf32>
    %175 = arith.negf %174 : vector<8x128xf32>
    %176 = math.exp %175 : vector<8x128xf32>
    %cst_35 = arith.constant 1.000000e+00 : f32
    %177 = vector.broadcast %cst_35 : f32 to vector<8x128xf32>
    %178 = arith.addf %177, %176 : vector<8x128xf32>
    %179 = arith.divf %177, %178 : vector<8x128xf32>
    %180 = arith.mulf %171, %153 : vector<8x128xf32>
    %181 = arith.mulf %165, %173 : vector<8x128xf32>
    %182 = arith.addf %180, %181 : vector<8x128xf32>
    %183 = math.tanh %182 : vector<8x128xf32>
    %184 = arith.mulf %179, %183 : vector<8x128xf32>
    %185 = vector.extract_strided_slice %7 {offsets = [6, 0, 0], sizes = [1, 8, 512], strides = [1, 1, 1]} : vector<8x8x512xf32> to vector<1x8x512xf32>
    %186 = vector.shape_cast %185 : vector<1x8x512xf32> to vector<8x512xf32>
    %cst_36 = arith.constant dense<0.000000e+00> : vector<8x512xf32>
    %187 = tpu.matmul %184, %8, %cst_36 {dimension_numbers = #tpu.dot_dimension_numbers<[1], [0], [0], [1], [0, 0, 1, 1], [], []>} : vector<8x128xf32>, vector<128x512xf32>, vector<8x512xf32> -> vector<8x512xf32>
    %188 = arith.addf %186, %187 : vector<8x512xf32>
    %189 = vector.extract_strided_slice %188 {offsets = [0, 0], sizes = [8, 128], strides = [1, 1]} : vector<8x512xf32> to vector<8x128xf32>
    %190 = arith.negf %189 : vector<8x128xf32>
    %191 = math.exp %190 : vector<8x128xf32>
    %cst_37 = arith.constant 1.000000e+00 : f32
    %192 = vector.broadcast %cst_37 : f32 to vector<8x128xf32>
    %193 = arith.addf %192, %191 : vector<8x128xf32>
    %194 = arith.divf %192, %193 : vector<8x128xf32>
    %195 = vector.extract_strided_slice %188 {offsets = [0, 128], sizes = [8, 128], strides = [1, 1]} : vector<8x512xf32> to vector<8x128xf32>
    %196 = arith.negf %195 : vector<8x128xf32>
    %197 = math.exp %196 : vector<8x128xf32>
    %cst_38 = arith.constant 1.000000e+00 : f32
    %198 = vector.broadcast %cst_38 : f32 to vector<8x128xf32>
    %199 = arith.addf %198, %197 : vector<8x128xf32>
    %200 = arith.divf %198, %199 : vector<8x128xf32>
    %201 = vector.extract_strided_slice %188 {offsets = [0, 256], sizes = [8, 128], strides = [1, 1]} : vector<8x512xf32> to vector<8x128xf32>
    %202 = math.tanh %201 : vector<8x128xf32>
    %203 = vector.extract_strided_slice %188 {offsets = [0, 384], sizes = [8, 128], strides = [1, 1]} : vector<8x512xf32> to vector<8x128xf32>
    %204 = arith.negf %203 : vector<8x128xf32>
    %205 = math.exp %204 : vector<8x128xf32>
    %cst_39 = arith.constant 1.000000e+00 : f32
    %206 = vector.broadcast %cst_39 : f32 to vector<8x128xf32>
    %207 = arith.addf %206, %205 : vector<8x128xf32>
    %208 = arith.divf %206, %207 : vector<8x128xf32>
    %209 = arith.mulf %200, %182 : vector<8x128xf32>
    %210 = arith.mulf %194, %202 : vector<8x128xf32>
    %211 = arith.addf %209, %210 : vector<8x128xf32>
    %212 = math.tanh %211 : vector<8x128xf32>
    %213 = arith.mulf %208, %212 : vector<8x128xf32>
    %214 = vector.extract_strided_slice %7 {offsets = [7, 0, 0], sizes = [1, 8, 512], strides = [1, 1, 1]} : vector<8x8x512xf32> to vector<1x8x512xf32>
    %215 = vector.shape_cast %214 : vector<1x8x512xf32> to vector<8x512xf32>
    %cst_40 = arith.constant dense<0.000000e+00> : vector<8x512xf32>
    %216 = tpu.matmul %213, %8, %cst_40 {dimension_numbers = #tpu.dot_dimension_numbers<[1], [0], [0], [1], [0, 0, 1, 1], [], []>} : vector<8x128xf32>, vector<128x512xf32>, vector<8x512xf32> -> vector<8x512xf32>
    %217 = arith.addf %215, %216 : vector<8x512xf32>
    %218 = vector.extract_strided_slice %217 {offsets = [0, 0], sizes = [8, 128], strides = [1, 1]} : vector<8x512xf32> to vector<8x128xf32>
    %219 = arith.negf %218 : vector<8x128xf32>
    %220 = math.exp %219 : vector<8x128xf32>
    %cst_41 = arith.constant 1.000000e+00 : f32
    %221 = vector.broadcast %cst_41 : f32 to vector<8x128xf32>
    %222 = arith.addf %221, %220 : vector<8x128xf32>
    %223 = arith.divf %221, %222 : vector<8x128xf32>
    %224 = vector.extract_strided_slice %217 {offsets = [0, 128], sizes = [8, 128], strides = [1, 1]} : vector<8x512xf32> to vector<8x128xf32>
    %225 = arith.negf %224 : vector<8x128xf32>
    %226 = math.exp %225 : vector<8x128xf32>
    %cst_42 = arith.constant 1.000000e+00 : f32
    %227 = vector.broadcast %cst_42 : f32 to vector<8x128xf32>
    %228 = arith.addf %227, %226 : vector<8x128xf32>
    %229 = arith.divf %227, %228 : vector<8x128xf32>
    %230 = vector.extract_strided_slice %217 {offsets = [0, 256], sizes = [8, 128], strides = [1, 1]} : vector<8x512xf32> to vector<8x128xf32>
    %231 = math.tanh %230 : vector<8x128xf32>
    %232 = vector.extract_strided_slice %217 {offsets = [0, 384], sizes = [8, 128], strides = [1, 1]} : vector<8x512xf32> to vector<8x128xf32>
    %233 = arith.negf %232 : vector<8x128xf32>
    %234 = math.exp %233 : vector<8x128xf32>
    %cst_43 = arith.constant 1.000000e+00 : f32
    %235 = vector.broadcast %cst_43 : f32 to vector<8x128xf32>
    %236 = arith.addf %235, %234 : vector<8x128xf32>
    %237 = arith.divf %235, %236 : vector<8x128xf32>
    %238 = arith.mulf %229, %211 : vector<8x128xf32>
    %239 = arith.mulf %223, %231 : vector<8x128xf32>
    %240 = arith.addf %238, %239 : vector<8x128xf32>
    %241 = math.tanh %240 : vector<8x128xf32>
    %242 = arith.mulf %237, %241 : vector<8x128xf32>
    %c0_44 = arith.constant 0 : index
    %c0_45 = arith.constant 0 : index
    %243 = vector.load %arg7[%c0_44, %c0_45] : memref<128x128xf32, #tpu.memory_space<vmem>>, vector<128x128xf32>
    %cst_46 = arith.constant dense<0.000000e+00> : vector<8x128xf32>
    %244 = tpu.matmul %242, %243, %cst_46 {dimension_numbers = #tpu.dot_dimension_numbers<[1], [0], [0], [1], [0, 0, 1, 1], [], []>} : vector<8x128xf32>, vector<128x128xf32>, vector<8x128xf32> -> vector<8x128xf32>
    %c0_47 = arith.constant 0 : index
    %c0_48 = arith.constant 0 : index
    %245 = vector.load %arg8[%c0_47, %c0_48] : memref<1x128xf32, #tpu.memory_space<vmem>>, vector<1x128xf32>
    %246 = vector.broadcast %245 : vector<1x128xf32> to vector<8x128xf32>
    %247 = arith.addf %244, %246 : vector<8x128xf32>
    %248 = arith.negf %247 : vector<8x128xf32>
    %249 = math.exp %248 : vector<8x128xf32>
    %cst_49 = arith.constant 1.000000e+00 : f32
    %250 = vector.broadcast %cst_49 : f32 to vector<8x128xf32>
    %251 = arith.addf %250, %249 : vector<8x128xf32>
    %252 = arith.divf %250, %251 : vector<8x128xf32>
    %c0_50 = arith.constant 0 : index
    %c0_51 = arith.constant 0 : index
    %253 = vector.load %arg9[%c0_50, %c0_51] : memref<8x384xf32, #tpu.memory_space<vmem>>, vector<8x128xf32>
    tpu.vector_store %arg9[%c0_50, %c0_51], %242 {strides = array<i32>} : memref<8x384xf32, #tpu.memory_space<vmem>>, vector<8x128xf32>,
    %c0_52 = arith.constant 0 : index
    %c128 = arith.constant 128 : index
    %254 = vector.load %arg9[%c0_52, %c128] : memref<8x384xf32, #tpu.memory_space<vmem>>, vector<8x128xf32>
    tpu.vector_store %arg9[%c0_52, %c128], %240 {strides = array<i32>} : memref<8x384xf32, #tpu.memory_space<vmem>>, vector<8x128xf32>,
    %c0_53 = arith.constant 0 : index
    %c256 = arith.constant 256 : index
    %255 = vector.load %arg9[%c0_53, %c256] : memref<8x384xf32, #tpu.memory_space<vmem>>, vector<8x128xf32>
    tpu.vector_store %arg9[%c0_53, %c256], %252 {strides = array<i32>} : memref<8x384xf32, #tpu.memory_space<vmem>>, vector<8x128xf32>,
    return
  }
  func.func @transform_0(%arg0: i32) -> (i32, i32, i32) {
    %c0_i32 = arith.constant 0 : i32
    %c0_i32_0 = arith.constant 0 : i32
    %c0_i32_1 = arith.constant 0 : i32
    return %c0_i32, %arg0, %c0_i32_0 : i32, i32, i32
  }
  func.func @transform_1(%arg0: i32) -> (i32, i32) {
    %c0_i32 = arith.constant 0 : i32
    %c0_i32_0 = arith.constant 0 : i32
    %c0_i32_1 = arith.constant 0 : i32
    return %c0_i32, %c0_i32_0 : i32, i32
  }
  func.func @transform_2(%arg0: i32) -> (i32, i32) {
    %c0_i32 = arith.constant 0 : i32
    %c0_i32_0 = arith.constant 0 : i32
    %c0_i32_1 = arith.constant 0 : i32
    return %c0_i32, %c0_i32_0 : i32, i32
  }
  func.func @transform_3(%arg0: i32) -> (i32, i32) {
    %c0_i32 = arith.constant 0 : i32
    %c0_i32_0 = arith.constant 0 : i32
    %c0_i32_1 = arith.constant 0 : i32
    return %c0_i32, %c0_i32_0 : i32, i32
  }
  func.func @transform_4(%arg0: i32) -> (i32, i32) {
    %c0_i32 = arith.constant 0 : i32
    %c0_i32_0 = arith.constant 0 : i32
    return %arg0, %c0_i32 : i32, i32
  }
  func.func @transform_5(%arg0: i32) -> (i32, i32) {
    %c0_i32 = arith.constant 0 : i32
    %c0_i32_0 = arith.constant 0 : i32
    return %arg0, %c0_i32 : i32, i32
  }
  func.func @transform_6(%arg0: i32) -> (i32, i32) {
    %c0_i32 = arith.constant 0 : i32
    %c0_i32_0 = arith.constant 0 : i32
    %c0_i32_1 = arith.constant 0 : i32
    return %c0_i32, %c0_i32_0 : i32, i32
  }
  func.func @transform_7(%arg0: i32) -> (i32, i32) {
    %c0_i32 = arith.constant 0 : i32
    %c0_i32_0 = arith.constant 0 : i32
    %c0_i32_1 = arith.constant 0 : i32
    return %c0_i32, %c0_i32_0 : i32, i32
  }
  func.func @transform_8(%arg0: i32) -> (i32, i32) {
    %c0_i32 = arith.constant 0 : i32
    %c0_i32_0 = arith.constant 0 : i32
    return %arg0, %c0_i32 : i32, i32
  }
}

</mosaic_0001>

<llo_original>
// kernel: lstm_tagger_forward_batched.1
$region0: #{lstm_tagger_forward_batched.1}
  #allocation0 [shape = 'u32[]', space=smem, size = 0x4, offset = 0x4, fixed_abs, tag = 'smem constant byte address 0x4 - core index']
  #allocation1 [shape = 'u32[144,128]{1,0:T(1,128)}', space=vmem, size = 0x12000, scoped, tag = 'internal scratch']
  %s0 = inlined_call_operand.vmem [shape: f32[8,16,16], index: 0, kind: input, shape index: {}]
  %s1 = inlined_call_operand.vmem [shape: f32[16,512], index: 1, kind: input, shape index: {}]
  %s2 = inlined_call_operand.hbm [shape: f32[128,512], index: 2, kind: input, shape index: {}]
  %s3 = inlined_call_operand.vmem [shape: f32[1,512], index: 3, kind: input, shape index: {}]
  %s4 = inlined_call_operand.vmem [shape: f32[16,128], index: 4, kind: input, shape index: {}]
  %s5 = inlined_call_operand.vmem [shape: f32[16,128], index: 5, kind: input, shape index: {}]
  %s6 = inlined_call_operand.vmem [shape: f32[128,128], index: 6, kind: input, shape index: {}]
  %s7 = inlined_call_operand.vmem [shape: f32[1,128], index: 7, kind: input, shape index: {}]
  %s8 = inlined_call_operand.vmem [shape: f32[16,384], index: 8, kind: output, shape index: {}]
  %s9 = sld [smem:[#allocation0]]
  $region107: #{lstm_tagger_forward_batched.1} parent=0
    _
  %s11 = ssub.s32 1, %s9
  %s12 = scalar_select 0, %s11, %s9
  $region1: #{lstm_tagger_forward_batched.1} parent=0
    #allocation2 [shape = 'u8[65536]{0}', space=vmem, size = 0x10000, scoped, tag = 'input window, operand 0']
    #allocation3 [shape = 'u8[262144]{0}', space=vmem, size = 0x40000, scoped, tag = 'input window, operand 2, single buffered']
    #allocation4 [shape = 's32[2]{0}', space=sflag, size = 0x8, scoped, tag = 'scoped memory for lstm_tagger_forward_batched.1']
    %13 = vsyncpa [#allocation4], 0
    loop: start=0, step=1, limit=4
    $region2: #{lstm_tagger_forward_batched.1} parent=1 // loop_pre_header
      _
    $region3: #{lstm_tagger_forward_batched.1} parent=1 // loop_header
      %s15 = sphi 0, %s19
      %p16 = scmp.ge.s32.totalorder %s15, 4
      %s25 = sphi 0, %s27
      %s28 = sphi 0, %s25
      %s29 = sphi 0, %s28
      %s45 = sphi 0, %s29
      %s49 = sphi 0, %s49
      %s51 = sphi 0, %s49
      %s52 = sphi 0, %s51
      %s66 = sphi 0, %s52
      %s70 = sphi 0, %s70
      %s72 = sphi 0, %s70
      %s73 = sphi 0, %s72
      %s87 = sphi 0, %s73
      %s91 = sphi 0, %s91
      %s93 = sphi 0, %s91
      %s94 = sphi 0, %s93
      %s108 = sphi 0, %s94
      %s114 = sphi 0, %s116
      %s117 = sphi 0, %s114
      %s118 = sphi 0, %s117
      %s134 = sphi 0, %s118
      %s140 = sphi 0, %s142
      %s143 = sphi 0, %s140
      %s144 = sphi 0, %s143
      %s160 = sphi 0, %s144
      %s164 = sphi 0, %s164
      %s166 = sphi 0, %s164
      %s167 = sphi 0, %s166
      %s181 = sphi 0, %s167
      %s185 = sphi 0, %s185
      %s187 = sphi 0, %s185
      %s188 = sphi 0, %s187
      %s202 = sphi 0, %s188
      %s208 = sphi 0, %s210
      %s211 = sphi 0, %s208
      %s212 = sphi 0, %s211
      %s228 = sphi 0, %s212
    $region4: #{lstm_tagger_forward_batched.1} parent=1 // loop_header_branch
      %18 = sbr.rel (%p16) target = $region8
    $region5: #{lstm_tagger_forward_batched.1} parent=1 // loop_body
      %s20 = ssub.s32 %s15, 1
      %s21 = ssub.s32 %s15, 2
      %s22 = sadd.s32 %s15, 1
      %s23 = ssub.s32 %s15, %s22
      %p24 = scmp.eq.s32.totalorder %s23, 0
      %s26 = sadd.s32 %s25, 1
      %s27 = scalar_select %p24, %s25, %s26
      %p30 = pneg %p24
      %p31 = scmp.eq.s32.totalorder %s15, 1
      %p32 = por %p30, %p31
      %p33 = scmp.ne.s32.totalorder %s25, %s28
      %p34 = scmp.eq.s32.totalorder %s15, 0
      %p35 = por %p33, %p34
      %p36 = scmp.ne.s32.totalorder %s25, %s28
      %p37 = scmp.eq.s32.totalorder %s20, 1
      %p38 = por %p36, %p37
      %p39 = scmp.ne.s32.totalorder %s28, %s29
      %p40 = scmp.eq.s32.totalorder %s20, 0
      %p41 = por %p39, %p40
      %p42 = scmp.ne.s32.totalorder %s28, %s29
      %p43 = scmp.eq.s32.totalorder %s21, 1
      %p44 = por %p42, %p43
      %p46 = scmp.ne.s32.totalorder %s29, %s45
      %p47 = scmp.eq.s32.totalorder %s21, 0
      %p48 = por %p46, %p47
      %s50 = sadd.s32 %s49, 1
      %p53 = scmp.eq.s32.totalorder %s15, 1
      %p54 = scmp.ne.s32.totalorder %s49, %s51
      %p55 = scmp.eq.s32.totalorder %s15, 0
      %p56 = por %p54, %p55
      %p57 = scmp.ne.s32.totalorder %s49, %s51
      %p58 = scmp.eq.s32.totalorder %s20, 1
      %p59 = por %p57, %p58
      %p60 = scmp.ne.s32.totalorder %s51, %s52
      %p61 = scmp.eq.s32.totalorder %s20, 0
      %p62 = por %p60, %p61
      %p63 = scmp.ne.s32.totalorder %s51, %s52
      %p64 = scmp.eq.s32.totalorder %s21, 1
      %p65 = por %p63, %p64
      %p67 = scmp.ne.s32.totalorder %s52, %s66
      %p68 = scmp.eq.s32.totalorder %s21, 0
      %p69 = por %p67, %p68
      %s71 = sadd.s32 %s70, 1
      %p74 = scmp.eq.s32.totalorder %s15, 1
      %p75 = scmp.ne.s32.totalorder %s70, %s72
      %p76 = scmp.eq.s32.totalorder %s15, 0
      %p77 = por %p75, %p76
      %p78 = scmp.ne.s32.totalorder %s70, %s72
      %p79 = scmp.eq.s32.totalorder %s20, 1
      %p80 = por %p78, %p79
      %p81 = scmp.ne.s32.totalorder %s72, %s73
      %p82 = scmp.eq.s32.totalorder %s20, 0
      %p83 = por %p81, %p82
      %p84 = scmp.ne.s32.totalorder %s72, %s73
      %p85 = scmp.eq.s32.totalorder %s21, 1
      %p86 = por %p84, %p85
      %p88 = scmp.ne.s32.totalorder %s73, %s87
      %p89 = scmp.eq.s32.totalorder %s21, 0
      %p90 = por %p88, %p89
      %s92 = sadd.s32 %s91, 1
      %p95 = scmp.eq.s32.totalorder %s15, 1
      %p96 = scmp.ne.s32.totalorder %s91, %s93
      %p97 = scmp.eq.s32.totalorder %s15, 0
      %p98 = por %p96, %p97
      %p99 = scmp.ne.s32.totalorder %s91, %s93
      %p100 = scmp.eq.s32.totalorder %s20, 1
      %p101 = por %p99, %p100
      %p102 = scmp.ne.s32.totalorder %s93, %s94
      %p103 = scmp.eq.s32.totalorder %s20, 0
      %p104 = por %p102, %p103
      %p105 = scmp.ne.s32.totalorder %s93, %s94
      %p106 = scmp.eq.s32.totalorder %s21, 1
      %p107 = por %p105, %p106
      %p109 = scmp.ne.s32.totalorder %s94, %s108
      %p110 = scmp.eq.s32.totalorder %s21, 0
      %p111 = por %p109, %p110
      %s112 = ssub.s32 %s15, %s22
      %p113 = scmp.eq.s32.totalorder %s112, 0
      %s115 = sadd.s32 %s114, 1
      %s116 = scalar_select %p113, %s114, %s115
      %p119 = pneg %p113
      %p120 = scmp.eq.s32.totalorder %s15, 1
      %p121 = por %p119, %p120
      %p122 = scmp.ne.s32.totalorder %s114, %s117
      %p123 = scmp.eq.s32.totalorder %s15, 0
      %p124 = por %p122, %p123
      %p125 = scmp.ne.s32.totalorder %s114, %s117
      %p126 = scmp.eq.s32.totalorder %s20, 1
      %p127 = por %p125, %p126
      %p128 = scmp.ne.s32.totalorder %s117, %s118
      %p129 = scmp.eq.s32.totalorder %s20, 0
      %p130 = por %p128, %p129
      %p131 = scmp.ne.s32.totalorder %s117, %s118
      %p132 = scmp.eq.s32.totalorder %s21, 1
      %p133 = por %p131, %p132
      %p135 = scmp.ne.s32.totalorder %s118, %s134
      %p136 = scmp.eq.s32.totalorder %s21, 0
      %p137 = por %p135, %p136
      %s138 = ssub.s32 %s15, %s22
      %p139 = scmp.eq.s32.totalorder %s138, 0
      %s141 = sadd.s32 %s140, 1
      %s142 = scalar_select %p139, %s140, %s141
      %p145 = pneg %p139
      %p146 = scmp.eq.s32.totalorder %s15, 1
      %p147 = por %p145, %p146
      %p148 = scmp.ne.s32.totalorder %s140, %s143
      %p149 = scmp.eq.s32.totalorder %s15, 0
      %p150 = por %p148, %p149
      %p151 = scmp.ne.s32.totalorder %s140, %s143
      %p152 = scmp.eq.s32.totalorder %s20, 1
      %p153 = por %p151, %p152
      %p154 = scmp.ne.s32.totalorder %s143, %s144
      %p155 = scmp.eq.s32.totalorder %s20, 0
      %p156 = por %p154, %p155
      %p157 = scmp.ne.s32.totalorder %s143, %s144
      %p158 = scmp.eq.s32.totalorder %s21, 1
      %p159 = por %p157, %p158
      %p161 = scmp.ne.s32.totalorder %s144, %s160
      %p162 = scmp.eq.s32.totalorder %s21, 0
      %p163 = por %p161, %p162
      %s165 = sadd.s32 %s164, 1
      %p168 = scmp.eq.s32.totalorder %s15, 1
      %p169 = scmp.ne.s32.totalorder %s164, %s166
      %p170 = scmp.eq.s32.totalorder %s15, 0
      %p171 = por %p169, %p170
      %p172 = scmp.ne.s32.totalorder %s164, %s166
      %p173 = scmp.eq.s32.totalorder %s20, 1
      %p174 = por %p172, %p173
      %p175 = scmp.ne.s32.totalorder %s166, %s167
      %p176 = scmp.eq.s32.totalorder %s20, 0
      %p177 = por %p175, %p176
      %p178 = scmp.ne.s32.totalorder %s166, %s167
      %p179 = scmp.eq.s32.totalorder %s21, 1
      %p180 = por %p178, %p179
      %p182 = scmp.ne.s32.totalorder %s167, %s181
      %p183 = scmp.eq.s32.totalorder %s21, 0
      %p184 = por %p182, %p183
      %s186 = sadd.s32 %s185, 1
      %p189 = scmp.eq.s32.totalorder %s15, 1
      %p190 = scmp.ne.s32.totalorder %s185, %s187
      %p191 = scmp.eq.s32.totalorder %s15, 0
      %p192 = por %p190, %p191
      %p193 = scmp.ne.s32.totalorder %s185, %s187
      %p194 = scmp.eq.s32.totalorder %s20, 1
      %p195 = por %p193, %p194
      %p196 = scmp.ne.s32.totalorder %s187, %s188
      %p197 = scmp.eq.s32.totalorder %s20, 0
      %p198 = por %p196, %p197
      %p199 = scmp.ne.s32.totalorder %s187, %s188
      %p200 = scmp.eq.s32.totalorder %s21, 1
      %p201 = por %p199, %p200
      %p203 = scmp.ne.s32.totalorder %s188, %s202
      %p204 = scmp.eq.s32.totalorder %s21, 0
      %p205 = por %p203, %p204
      %s206 = ssub.s32 %s15, %s22
      %p207 = scmp.eq.s32.totalorder %s206, 0
      %s209 = sadd.s32 %s208, 1
      %s210 = scalar_select %p207, %s208, %s209
      %p213 = pneg %p207
      %p214 = scmp.eq.s32.totalorder %s15, 1
      %p215 = por %p213, %p214
      %p216 = scmp.ne.s32.totalorder %s208, %s211
      %p217 = scmp.eq.s32.totalorder %s15, 0
      %p218 = por %p216, %p217
      %p219 = scmp.ne.s32.totalorder %s208, %s211
      %p220 = scmp.eq.s32.totalorder %s20, 1
      %p221 = por %p219, %p220
      %p222 = scmp.ne.s32.totalorder %s211, %s212
      %p223 = scmp.eq.s32.totalorder %s20, 0
      %p224 = por %p222, %p223
      %p225 = scmp.ne.s32.totalorder %s211, %s212
      %p226 = scmp.eq.s32.totalorder %s21, 1
      %p227 = por %p225, %p226
      %p229 = scmp.ne.s32.totalorder %s212, %s228
      %p230 = scmp.eq.s32.totalorder %s21, 0
      %p231 = por %p229, %p230
      %p232 = scmp.le.s32.totalorder 1, %s15
      %p233 = scmp.lt.s32.totalorder %s15, 3
      %p234 = pnand %p232, %p233
      %p235 = pneg %p234
      // Predicated region
      $region9: #{lstm_tagger_forward_batched.1} parent=5 // pred_check
        _
      $region10: #{lstm_tagger_forward_batched.1} parent=5 // pred_check_branch
        %237 = sbr.rel (%p234) target = $region12
      $region11: #{lstm_tagger_forward_batched.1} parent=5 // pred_region
        %s238 = ssub.s32 %s15, 1
        // Predicated region
        $region13: #{lstm_tagger_forward_batched.1} parent=11 // pred_check
          %p239 = pneg %p62
        $region14: #{lstm_tagger_forward_batched.1} parent=11 // pred_check_branch
          %241 = sbr.rel (%p239) target = $region16
        $region15: #{lstm_tagger_forward_batched.1} parent=11 // pred_region
          _
        $region16: #{lstm_tagger_forward_batched.1} parent=11 // pred_fallthru
          _
        // Predicated region
        $region17: #{lstm_tagger_forward_batched.1} parent=11 // pred_check
          %p242 = pneg %p83
        $region18: #{lstm_tagger_forward_batched.1} parent=11 // pred_check_branch
          %244 = sbr.rel (%p242) target = $region20
        $region19: #{lstm_tagger_forward_batched.1} parent=11 // pred_region
          %s246 = ssub.s32 8192, 8192
          %247 = vsyncadd [#allocation4], %s246
          %s248 = sshll.u32 [#allocation3], 4
          %s249 = int_to_ptr.vmem [resolvable:$true] %s248
          %254 = dma.hbm_to_vmem [thread:$0]  %s2, 8192, %s249, [#allocation4], 512, 512, 32
        $region20: #{lstm_tagger_forward_batched.1} parent=11 // pred_fallthru
          _
        // Predicated region
        $region21: #{lstm_tagger_forward_batched.1} parent=11 // pred_check
          %p255 = pneg %p104
        $region22: #{lstm_tagger_forward_batched.1} parent=11 // pred_check_branch
          %257 = sbr.rel (%p255) target = $region24
        $region23: #{lstm_tagger_forward_batched.1} parent=11 // pred_region
          _
        $region24: #{lstm_tagger_forward_batched.1} parent=11 // pred_fallthru
          _
        // Predicated region
        $region25: #{lstm_tagger_forward_batched.1} parent=11 // pred_check
          %p258 = pneg %p177
        $region26: #{lstm_tagger_forward_batched.1} parent=11 // pred_check_branch
          %260 = sbr.rel (%p258) target = $region28
        $region27: #{lstm_tagger_forward_batched.1} parent=11 // pred_region
          _
        $region28: #{lstm_tagger_forward_batched.1} parent=11 // pred_fallthru
          _
        // Predicated region
        $region29: #{lstm_tagger_forward_batched.1} parent=11 // pred_check
          %p261 = pneg %p198
        $region30: #{lstm_tagger_forward_batched.1} parent=11 // pred_check_branch
          %263 = sbr.rel (%p261) target = $region32
        $region31: #{lstm_tagger_forward_batched.1} parent=11 // pred_region
          _
        $region32: #{lstm_tagger_forward_batched.1} parent=11 // pred_fallthru
          _
      $region12: #{lstm_tagger_forward_batched.1} parent=5 // pred_fallthru
        _
      %p264 = scmp.lt.s32.totalorder %s15, 2
      // Predicated region
      $region33: #{lstm_tagger_forward_batched.1} parent=5 // pred_check
        %p265 = pneg %p264
      $region34: #{lstm_tagger_forward_batched.1} parent=5 // pred_check_branch
        %267 = sbr.rel (%p265) target = $region36
      $region35: #{lstm_tagger_forward_batched.1} parent=5 // pred_region
        // Predicated region
        $region37: #{lstm_tagger_forward_batched.1} parent=35 // pred_check
          %p268 = pneg %p35
        $region38: #{lstm_tagger_forward_batched.1} parent=35 // pred_check_branch
          %270 = sbr.rel (%p268) target = $region40
        $region39: #{lstm_tagger_forward_batched.1} parent=35 // pred_region
          %s271 = sand.u32 %s25, 1
          %s272 = sand.u32 %s25, 1
          %s273 = smul.addr %s272, 64
          %s274 = scalar_lea.vmem [#allocation2], %s273
          %s275 = smul.addr %s15, 8
          %s276 = scalar_lea.vmem %s0, %s275
          // Predicated region
          $region41: #{lstm_tagger_forward_batched.1} parent=39 // pred_check
            _
          $region42: #{lstm_tagger_forward_batched.1} parent=39 // pred_check_branch
            %278 = sbr.rel (0) target = $region44
          $region43: #{lstm_tagger_forward_batched.1} parent=39 // pred_region
            // Predicated region
            $region45: #{lstm_tagger_forward_batched.1} parent=43 // pred_check
              _
            $region46: #{lstm_tagger_forward_batched.1} parent=43 // pred_check_branch
              %280 = sbr.rel (0) target = $region48
            $region47: #{lstm_tagger_forward_batched.1} parent=43 // pred_region
              // Predicated region
              $region60: #{lstm_tagger_forward_batched.1} parent=47 // pred_check
                _
              $region61: #{lstm_tagger_forward_batched.1} parent=47 // pred_check_branch
                %310 = sbr.rel (0) target = $region63
              $region62: #{lstm_tagger_forward_batched.1} parent=47 // pred_region
                loop: start=0, step=1, limit=1
                $region64: #{lstm_tagger_forward_batched.1} parent=62 // loop_pre_header
                  _
                $region65: #{lstm_tagger_forward_batched.1} parent=62 // loop_header
                  %s312 = sphi 0, %s316
                  %p313 = scmp.ge.s32.totalorder %s312, 1
                  %s317 = sphi %s276, %s276
                  %s318 = sphi %s274, %s274
                $region66: #{lstm_tagger_forward_batched.1} parent=62 // loop_header_branch
                  %315 = sbr.rel (%p313) target = $region70
                $region67: #{lstm_tagger_forward_batched.1} parent=62 // loop_body
                  %v319 = vld [vmem:[%s317] sm:$0xff]
                  %320 = vst [vmem:[%s318] sm:$0xff] %v319
                  %v321 = vld [vmem:[%s317 + $0x10] sm:$0xff]
                  %322 = vst [vmem:[%s318 + $0x8] sm:$0xff] %v321
                  %v323 = vld [vmem:[%s317 + $0x20] sm:$0xff]
                  %324 = vst [vmem:[%s318 + $0x10] sm:$0xff] %v323
                  %v325 = vld [vmem:[%s317 + $0x30] sm:$0xff]
                  %326 = vst [vmem:[%s318 + $0x18] sm:$0xff] %v325
                  %v327 = vld [vmem:[%s317 + $0x40] sm:$0xff]
                  %328 = vst [vmem:[%s318 + $0x20] sm:$0xff] %v327
                  %v329 = vld [vmem:[%s317 + $0x50] sm:$0xff]
                  %330 = vst [vmem:[%s318 + $0x28] sm:$0xff] %v329
                  %v331 = vld [vmem:[%s317 + $0x60] sm:$0xff]
                  %332 = vst [vmem:[%s318 + $0x30] sm:$0xff] %v331
                  %v333 = vld [vmem:[%s317 + $0x70] sm:$0xff]
                  %334 = vst [vmem:[%s318 + $0x38] sm:$0xff] %v333
                $region68: #{lstm_tagger_forward_batched.1} parent=62 // loop_footer
                  %s316 = sadd.s32 1, %s312
                $region69: #{lstm_tagger_forward_batched.1} parent=62 // loop_footer_branch
                  %311 = sbr.rel target = $region65
                $region70: #{lstm_tagger_forward_batched.1} parent=62 // loop_exit
                  _
              $region63: #{lstm_tagger_forward_batched.1} parent=47 // pred_fallthru
                _
              // Predicated region
              $region71: #{lstm_tagger_forward_batched.1} parent=47 // pred_check
                _
              $region72: #{lstm_tagger_forward_batched.1} parent=47 // pred_check_branch
                %336 = sbr.rel target = $region74
              $region73: #{lstm_tagger_forward_batched.1} parent=47 // pred_region
                _
              $region74: #{lstm_tagger_forward_batched.1} parent=47 // pred_fallthru
                _
            $region48: #{lstm_tagger_forward_batched.1} parent=43 // pred_fallthru
              _
            // Predicated region
            $region49: #{lstm_tagger_forward_batched.1} parent=43 // pred_check
              _
            $region50: #{lstm_tagger_forward_batched.1} parent=43 // pred_check_branch
              %282 = sbr.rel target = $region52
            $region51: #{lstm_tagger_forward_batched.1} parent=43 // pred_region
              %s284 = ssub.s32 256, 1
              loop: start=0, step=1, limit=1
              $region53: #{lstm_tagger_forward_batched.1} parent=51 // loop_pre_header
                _
              $region54: #{lstm_tagger_forward_batched.1} parent=51 // loop_header
                %s286 = sphi 0, %s290
                %p287 = scmp.ge.s32.totalorder %s286, 1
                %s291 = sphi %s276, %s276
                %s292 = sphi %s274, %s274
              $region55: #{lstm_tagger_forward_batched.1} parent=51 // loop_header_branch
                %289 = sbr.rel (%p287) target = $region59
              $region56: #{lstm_tagger_forward_batched.1} parent=51 // loop_body
                %v293 = vld [vmem:[%s291] sm:%s284]
                %294 = vst [vmem:[%s292] sm:%s284] %v293
                %v295 = vld [vmem:[%s291 + $0x10] sm:%s284]
                %296 = vst [vmem:[%s292 + $0x8] sm:%s284] %v295
                %v297 = vld [vmem:[%s291 + $0x20] sm:%s284]
                %298 = vst [vmem:[%s292 + $0x10] sm:%s284] %v297
                %v299 = vld [vmem:[%s291 + $0x30] sm:%s284]
                %300 = vst [vmem:[%s292 + $0x18] sm:%s284] %v299
                %v301 = vld [vmem:[%s291 + $0x40] sm:%s284]
                %302 = vst [vmem:[%s292 + $0x20] sm:%s284] %v301
                %v303 = vld [vmem:[%s291 + $0x50] sm:%s284]
                %304 = vst [vmem:[%s292 + $0x28] sm:%s284] %v303
                %v305 = vld [vmem:[%s291 + $0x60] sm:%s284]
                %306 = vst [vmem:[%s292 + $0x30] sm:%s284] %v305
                %v307 = vld [vmem:[%s291 + $0x70] sm:%s284]
                %308 = vst [vmem:[%s292 + $0x38] sm:%s284] %v307
              $region57: #{lstm_tagger_forward_batched.1} parent=51 // loop_footer
                %s290 = sadd.s32 1, %s286
              $region58: #{lstm_tagger_forward_batched.1} parent=51 // loop_footer_branch
                %285 = sbr.rel target = $region54
              $region59: #{lstm_tagger_forward_batched.1} parent=51 // loop_exit
                _
            $region52: #{lstm_tagger_forward_batched.1} parent=43 // pred_fallthru
              _
          $region44: #{lstm_tagger_forward_batched.1} parent=39 // pred_fallthru
            _
          %337 = vnop
        $region40: #{lstm_tagger_forward_batched.1} parent=35 // pred_fallthru
          _
        // Predicated region
        $region75: #{lstm_tagger_forward_batched.1} parent=35 // pred_check
          %p338 = pneg %p124
        $region76: #{lstm_tagger_forward_batched.1} parent=35 // pred_check_branch
          %340 = sbr.rel (%p338) target = $region78
        $region77: #{lstm_tagger_forward_batched.1} parent=35 // pred_region
          %p341 = scmp.lt.s32.totalorder %s15, 1
          %s342 = scalar_select %p341, %s15, 1
          %s343 = smul.addr %s342, 8
          %s344 = scalar_lea.vmem %s4, %s343
        $region78: #{lstm_tagger_forward_batched.1} parent=35 // pred_fallthru
          _
        // Predicated region
        $region79: #{lstm_tagger_forward_batched.1} parent=35 // pred_check
          %p345 = pneg %p150
        $region80: #{lstm_tagger_forward_batched.1} parent=35 // pred_check_branch
          %347 = sbr.rel (%p345) target = $region82
        $region81: #{lstm_tagger_forward_batched.1} parent=35 // pred_region
          %p348 = scmp.lt.s32.totalorder %s15, 1
          %s349 = scalar_select %p348, %s15, 1
          %s350 = smul.addr %s349, 8
          %s351 = scalar_lea.vmem %s5, %s350
        $region82: #{lstm_tagger_forward_batched.1} parent=35 // pred_fallthru
          _
      $region36: #{lstm_tagger_forward_batched.1} parent=5 // pred_fallthru
        _
      %p352 = scmp.le.s32.totalorder 1, %s15
      %p353 = scmp.lt.s32.totalorder %s15, 3
      %p354 = pnand %p352, %p353
      %p355 = pneg %p354
      // Predicated region
      $region83: #{lstm_tagger_forward_batched.1} parent=5 // pred_check
        _
      $region84: #{lstm_tagger_forward_batched.1} parent=5 // pred_check_branch
        %357 = sbr.rel (%p354) target = $region86
      $region85: #{lstm_tagger_forward_batched.1} parent=5 // pred_region
        %s358 = ssub.s32 %s15, 1
        %s359 = sand.u32 %s28, 1
        %s360 = sand.u32 %s28, 1
        %s361 = smul.addr %s360, 64
        %s362 = scalar_lea.vmem [#allocation2], %s361
        // Predicated region
        $region87: #{lstm_tagger_forward_batched.1} parent=85 // pred_check
          %p363 = pneg %p41
        $region88: #{lstm_tagger_forward_batched.1} parent=85 // pred_check_branch
          %365 = sbr.rel (%p363) target = $region90
        $region89: #{lstm_tagger_forward_batched.1} parent=85 // pred_region
          _
        $region90: #{lstm_tagger_forward_batched.1} parent=85 // pred_fallthru
          _
        // Predicated region
        $region91: #{lstm_tagger_forward_batched.1} parent=85 // pred_check
          %p366 = pneg %p83
        $region92: #{lstm_tagger_forward_batched.1} parent=85 // pred_check_branch
          %368 = sbr.rel (%p366) target = $region94
        $region93: #{lstm_tagger_forward_batched.1} parent=85 // pred_region
          %369 = dma.done [#allocation4], 8192
        $region94: #{lstm_tagger_forward_batched.1} parent=85 // pred_fallthru
          _
        %s370 = sand.u32 %s28, 1
        %s371 = sand.u32 %s28, 1
        %s372 = smul.addr %s371, 64
        %s373 = scalar_lea.vmem [#allocation2], %s372
        %p374 = pneg %p41
        %p375 = pneg %p38
        %p376 = pneg %p62
        %p377 = pneg %p59
        %p378 = pneg %p83
        %p379 = pneg %p80
        %p380 = pneg %p104
        %p381 = pneg %p101
        %p382 = scmp.lt.s32.totalorder %s20, 1
        %s383 = scalar_select %p382, %s20, 1
        %s384 = smul.addr %s383, 8
        %s385 = scalar_lea.vmem %s4, %s384
        %p386 = pneg %p130
        %p387 = pneg %p127
        %p388 = scmp.lt.s32.totalorder %s20, 1
        %s389 = scalar_select %p388, %s20, 1
        %s390 = smul.addr %s389, 8
        %s391 = scalar_lea.vmem %s5, %s390
        %p392 = pneg %p156
        %p393 = pneg %p153
        %p394 = pneg %p177
        %p395 = pneg %p174
        %p396 = pneg %p198
        %p397 = pneg %p195
        %p398 = pneg %p224
        %p399 = pneg %p221
        %p400 = scmp.lt.s32.totalorder %s20, 1
        %s401 = scalar_select %p400, %s20, 1
        %s402 = smul.addr %s401, 3
        %s403 = smul.addr %s402, 8
        %s404 = scalar_lea.vmem %s8, %s403
        %p405 = scmp.lt.s32.totalorder %s20, 1
        %s406 = scalar_select %p405, %s20, 1
        %s407 = smul.addr %s406, 8
        %s408 = scalar_lea.vmem %s4, %s407
        %p409 = scmp.lt.s32.totalorder %s20, 1
        %s410 = scalar_select %p409, %s20, 1
        %s411 = smul.addr %s410, 8
        %s412 = scalar_lea.vmem %s5, %s411
        %p413 = scmp.lt.s32.totalorder %s20, 1
        %s414 = scalar_select %p413, %s20, 1
        %s415 = smul.addr %s414, 3
        %s416 = smul.addr %s415, 8
        %s417 = scalar_lea.vmem %s8, %s416
        %v418 = vld [vmem:[%s362] sm:$0xff]
        %v419 = vld [vmem:[%s362 + $0x8] sm:$0xff]
        %v420 = vld [vmem:[%s362 + $0x10] sm:$0xff]
        %v421 = vld [vmem:[%s362 + $0x18] sm:$0xff]
        %v422 = vld [vmem:[%s362 + $0x20] sm:$0xff]
        %v423 = vld [vmem:[%s362 + $0x28] sm:$0xff]
        %v424 = vld [vmem:[%s362 + $0x30] sm:$0xff]
        %v425 = vld [vmem:[%s362 + $0x38] sm:$0xff]
        %v426 = vld [vmem:[%s1] sm:$0xff]
        %v427 = vld [vmem:[%s1 + $0x8] sm:$0xff]
        %v428 = vld [vmem:[%s1 + $0x10] sm:$0xff]
        %v429 = vld [vmem:[%s1 + $0x18] sm:$0xff]
        %v430 = vld [vmem:[%s1 + $0x20] sm:$0xff]
        %v431 = vld [vmem:[%s1 + $0x28] sm:$0xff]
        %v432 = vld [vmem:[%s1 + $0x30] sm:$0xff]
        %v433 = vld [vmem:[%s1 + $0x38] sm:$0xff]
        %v434 = vld [vmem:[%s3] sm:$0xf]
        %v436 = vlaneseq
        %v437 = vshrl.u32 %v436, 7
        %v438 = vsub.s32 0, %v437
        %v439 = vrot.slane %v434, %v438
        %v440 = vlaneseq
        %v441 = vshrl.u32 %v440, 7
        %v442 = vsub.s32 1, %v441
        %v443 = vrot.slane %v434, %v442
        %v444 = vlaneseq
        %v445 = vshrl.u32 %v444, 7
        %v446 = vsub.s32 2, %v445
        %v447 = vrot.slane %v434, %v446
        %v448 = vlaneseq
        %v449 = vshrl.u32 %v448, 7
        %v450 = vsub.s32 3, %v449
        %v451 = vrot.slane %v434, %v450
        %vm456 = vcmask 130048
        %v458 = vsel %vm456, %v418, 0
        %v461 = vsel %vm456, %v419, 0
        %v464 = vsel %vm456, %v420, 0
        %v467 = vsel %vm456, %v421, 0
        %v470 = vsel %vm456, %v422, 0
        %v473 = vsel %vm456, %v423, 0
        %v476 = vsel %vm456, %v424, 0
        %v479 = vsel %vm456, %v425, 0
        %481 = vmatprep.subr.mxu0 0.0
        %482 = vmatpush1.msra.mxu0 0.0
        %483 = vmatprep.subr.mxu0 0.0
        %484 = vmatpush1.msra.mxu0 0.0
        %485 = vmatprep.subr.mxu0 0.0
        %486 = vmatpush1.msra.mxu0 0.0
        %487 = vmatprep.subr.mxu0 0.0
        %488 = vmatpush1.msra.mxu0 0.0
        %489 = vmatprep.subr.mxu0 0.0
        %490 = vmatpush1.msra.mxu0 0.0
        %491 = vmatprep.subr.mxu0 0.0
        %492 = vmatpush1.msra.mxu0 0.0
        %493 = vmatprep.subr.mxu0 0.0
        %494 = vmatpush1.msra.mxu0 0.0
        %495 = vmatprep.subr.mxu0 0.0
        %496 = vmatpush1.msra.mxu0 0.0
        %497 = vmatprep.subr.mxu0 0.0
        %498 = vmatpush1.msra.mxu0 0.0
        %499 = vmatprep.subr.mxu0 0.0
        %500 = vmatpush1.msra.mxu0 0.0
        %501 = vmatprep.subr.mxu0 0.0
        %502 = vmatpush1.msra.mxu0 0.0
        %503 = vmatprep.subr.mxu0 0.0
        %504 = vmatpush1.msra.mxu0 0.0
        %505 = vmatprep.subr.mxu0 0.0
        %506 = vmatpush1.msra.mxu0 0.0
        %507 = vmatprep.subr.mxu0 0.0
        %508 = vmatpush1.msra.mxu0 0.0
        %509 = vmatprep.subr.mxu0 %v431
        %510 = vmatpush1.msra.mxu0 %v430
        %511 = vmatprep.subr.mxu0 %v427
        %512 = vmatpush1.msra.mxu0 %v426
        %513 = vmatprep.subr.mxu0 0.0
        %514 = vmatpush2.msra.mxu0 0.0
        %515 = vmatprep.subr.mxu0 0.0
        %516 = vmatpush2.msra.mxu0 0.0
        %517 = vmatprep.subr.mxu0 0.0
        %518 = vmatpush2.msra.mxu0 0.0
        %519 = vmatprep.subr.mxu0 0.0
        %520 = vmatpush2.msra.mxu0 0.0
        %521 = vmatprep.subr.mxu0 0.0
        %522 = vmatpush2.msra.mxu0 0.0
        %523 = vmatprep.subr.mxu0 0.0
        %524 = vmatpush2.msra.mxu0 0.0
        %525 = vmatprep.subr.mxu0 0.0
        %526 = vmatpush2.msra.mxu0 0.0
        %527 = vmatprep.subr.mxu0 0.0
        %528 = vmatpush2.msra.mxu0 0.0
        %529 = vmatprep.subr.mxu0 0.0
        %530 = vmatpush2.msra.mxu0 0.0
        %531 = vmatprep.subr.mxu0 0.0
        %532 = vmatpush2.msra.mxu0 0.0
        %533 = vmatprep.subr.mxu0 0.0
        %534 = vmatpush2.msra.mxu0 0.0
        %535 = vmatprep.subr.mxu0 0.0
        %536 = vmatpush2.msra.mxu0 0.0
        %537 = vmatprep.subr.mxu0 0.0
        %538 = vmatpush2.msra.mxu0 0.0
        %539 = vmatprep.subr.mxu0 0.0
        %540 = vmatpush2.msra.mxu0 0.0
        %541 = vmatprep.subr.mxu0 0.0
        %542 = vmatpush2.msra.mxu0 0.0
        %543 = vmatprep.subr.mxu0 0.0
        %544 = vmatpush2.msra.mxu0 0.0
        %545 = vmatprep.mubr.f32.mxu0 0.0
        %546 = vmatmul.mubr.f32.gmra.mxu0 %v458
        %v547 = vpop.f32.mrf.mxu0
        %v548 = vadd.f32 %v439, %v547
        %v549 = vpop.f32.mrf.mxu0
        %v550 = vadd.f32 %v443, %v549
        %551 = vmatprep.mubr.f32.mxu0 0.0
        %552 = vmatmul.mubr.f32.gmra.mxu0 %v461
        %v553 = vpop.f32.mrf.mxu0
        %v554 = vadd.f32 %v439, %v553
        %v555 = vpop.f32.mrf.mxu0
        %v556 = vadd.f32 %v443, %v555
        %557 = vmatprep.mubr.f32.mxu0 0.0
        %558 = vmatmul.mubr.f32.gmra.mxu0 %v464
        %v559 = vpop.f32.mrf.mxu0
        %v560 = vadd.f32 %v439, %v559
        %v561 = vpop.f32.mrf.mxu0
        %v562 = vadd.f32 %v443, %v561
        %563 = vmatprep.mubr.f32.mxu0 0.0
        %564 = vmatmul.mubr.f32.gmra.mxu0 %v467
        %v565 = vpop.f32.mrf.mxu0
        %v566 = vadd.f32 %v439, %v565
        %v567 = vpop.f32.mrf.mxu0
        %v568 = vadd.f32 %v443, %v567
        %569 = vmatprep.mubr.f32.mxu0 0.0
        %570 = vmatmul.mubr.f32.gmra.mxu0 %v470
        %v571 = vpop.f32.mrf.mxu0
        %v572 = vadd.f32 %v439, %v571
        %v573 = vpop.f32.mrf.mxu0
        %v574 = vadd.f32 %v443, %v573
        %575 = vmatprep.mubr.f32.mxu0 0.0
        %576 = vmatmul.mubr.f32.gmra.mxu0 %v473
        %v577 = vpop.f32.mrf.mxu0
        %v578 = vadd.f32 %v439, %v577
        %v579 = vpop.f32.mrf.mxu0
        %v580 = vadd.f32 %v443, %v579
        %581 = vmatprep.mubr.f32.mxu0 0.0
        %582 = vmatmul.mubr.f32.gmra.mxu0 %v476
        %v583 = vpop.f32.mrf.mxu0
        %v584 = vadd.f32 %v439, %v583
        %v585 = vpop.f32.mrf.mxu0
        %v586 = vadd.f32 %v443, %v585
        %587 = vmatprep.mubr.f32.mxu0 0.0
        %588 = vmatmul.mubr.f32.gmra.mxu0 %v479
        %v589 = vpop.f32.mrf.mxu0
        %v590 = vadd.f32 %v439, %v589
        %v591 = vpop.f32.mrf.mxu0
        %v592 = vadd.f32 %v443, %v591
        %593 = vdwg.mxu0
        %594 = vmatprep.subr.mxu0 0.0
        %595 = vmatpush1.msra.mxu0 0.0
        %596 = vmatprep.subr.mxu0 0.0
        %597 = vmatpush1.msra.mxu0 0.0
        %598 = vmatprep.subr.mxu0 0.0
        %599 = vmatpush1.msra.mxu0 0.0
        %600 = vmatprep.subr.mxu0 0.0
        %601 = vmatpush1.msra.mxu0 0.0
        %602 = vmatprep.subr.mxu0 0.0
        %603 = vmatpush1.msra.mxu0 0.0
        %604 = vmatprep.subr.mxu0 0.0
        %605 = vmatpush1.msra.mxu0 0.0
        %606 = vmatprep.subr.mxu0 0.0
        %607 = vmatpush1.msra.mxu0 0.0
        %608 = vmatprep.subr.mxu0 0.0
        %609 = vmatpush1.msra.mxu0 0.0
        %610 = vmatprep.subr.mxu0 0.0
        %611 = vmatpush1.msra.mxu0 0.0
        %612 = vmatprep.subr.mxu0 0.0
        %613 = vmatpush1.msra.mxu0 0.0
        %614 = vmatprep.subr.mxu0 0.0
        %615 = vmatpush1.msra.mxu0 0.0
        %616 = vmatprep.subr.mxu0 0.0
        %617 = vmatpush1.msra.mxu0 0.0
        %618 = vmatprep.subr.mxu0 0.0
        %619 = vmatpush1.msra.mxu0 0.0
        %620 = vmatprep.subr.mxu0 0.0
        %621 = vmatpush1.msra.mxu0 0.0
        %622 = vmatprep.subr.mxu0 %v433
        %623 = vmatpush1.msra.mxu0 %v432
        %624 = vmatprep.subr.mxu0 %v429
        %625 = vmatpush1.msra.mxu0 %v428
        %626 = vmatprep.subr.mxu0 0.0
        %627 = vmatpush2.msra.mxu0 0.0
        %628 = vmatprep.subr.mxu0 0.0
        %629 = vmatpush2.msra.mxu0 0.0
        %630 = vmatprep.subr.mxu0 0.0
        %631 = vmatpush2.msra.mxu0 0.0
        %632 = vmatprep.subr.mxu0 0.0
        %633 = vmatpush2.msra.mxu0 0.0
        %634 = vmatprep.subr.mxu0 0.0
        %635 = vmatpush2.msra.mxu0 0.0
        %636 = vmatprep.subr.mxu0 0.0
        %637 = vmatpush2.msra.mxu0 0.0
        %638 = vmatprep.subr.mxu0 0.0
        %639 = vmatpush2.msra.mxu0 0.0
        %640 = vmatprep.subr.mxu0 0.0
        %641 = vmatpush2.msra.mxu0 0.0
        %642 = vmatprep.subr.mxu0 0.0
        %643 = vmatpush2.msra.mxu0 0.0
        %644 = vmatprep.subr.mxu0 0.0
        %645 = vmatpush2.msra.mxu0 0.0
        %646 = vmatprep.subr.mxu0 0.0
        %647 = vmatpush2.msra.mxu0 0.0
        %648 = vmatprep.subr.mxu0 0.0
        %649 = vmatpush2.msra.mxu0 0.0
        %650 = vmatprep.subr.mxu0 0.0
        %651 = vmatpush2.msra.mxu0 0.0
        %652 = vmatprep.subr.mxu0 0.0
        %653 = vmatpush2.msra.mxu0 0.0
        %654 = vmatprep.subr.mxu0 0.0
        %655 = vmatpush2.msra.mxu0 0.0
        %656 = vmatprep.subr.mxu0 0.0
        %657 = vmatpush2.msra.mxu0 0.0
        %658 = vmatprep.mubr.f32.mxu0 0.0
        %659 = vmatmul.mubr.f32.gmra.mxu0 %v458
        %v660 = vpop.f32.mrf.mxu0
        %v661 = vadd.f32 %v447, %v660
        %v662 = vpop.f32.mrf.mxu0
        %v663 = vadd.f32 %v451, %v662
        %664 = vmatprep.mubr.f32.mxu0 0.0
        %665 = vmatmul.mubr.f32.gmra.mxu0 %v461
        %v666 = vpop.f32.mrf.mxu0
        %v667 = vadd.f32 %v447, %v666
        %v668 = vpop.f32.mrf.mxu0
        %v669 = vadd.f32 %v451, %v668
        %670 = vmatprep.mubr.f32.mxu0 0.0
        %671 = vmatmul.mubr.f32.gmra.mxu0 %v464
        %v672 = vpop.f32.mrf.mxu0
        %v673 = vadd.f32 %v447, %v672
        %v674 = vpop.f32.mrf.mxu0
        %v675 = vadd.f32 %v451, %v674
        %676 = vmatprep.mubr.f32.mxu0 0.0
        %677 = vmatmul.mubr.f32.gmra.mxu0 %v467
        %v678 = vpop.f32.mrf.mxu0
        %v679 = vadd.f32 %v447, %v678
        %v680 = vpop.f32.mrf.mxu0
        %v681 = vadd.f32 %v451, %v680
        %682 = vmatprep.mubr.f32.mxu0 0.0
        %683 = vmatmul.mubr.f32.gmra.mxu0 %v470
        %v684 = vpop.f32.mrf.mxu0
        %v685 = vadd.f32 %v447, %v684
        %v686 = vpop.f32.mrf.mxu0
        %v687 = vadd.f32 %v451, %v686
        %688 = vmatprep.mubr.f32.mxu0 0.0
        %689 = vmatmul.mubr.f32.gmra.mxu0 %v473
        %v690 = vpop.f32.mrf.mxu0
        %v691 = vadd.f32 %v447, %v690
        %v692 = vpop.f32.mrf.mxu0
        %v693 = vadd.f32 %v451, %v692
        %694 = vmatprep.mubr.f32.mxu0 0.0
        %695 = vmatmul.mubr.f32.gmra.mxu0 %v476
        %v696 = vpop.f32.mrf.mxu0
        %v697 = vadd.f32 %v447, %v696
        %v698 = vpop.f32.mrf.mxu0
        %v699 = vadd.f32 %v451, %v698
        %700 = vmatprep.mubr.f32.mxu0 0.0
        %701 = vmatmul.mubr.f32.gmra.mxu0 %v479
        %v702 = vpop.f32.mrf.mxu0
        %v703 = vadd.f32 %v447, %v702
        %v704 = vpop.f32.mrf.mxu0
        %v705 = vadd.f32 %v451, %v704
        %706 = vdwg.mxu0
        %v707 = vld [vmem:[#allocation3] sm:$0xff]
        %v708 = vld [vmem:[#allocation3 + $0x8] sm:$0xff]
        %v709 = vld [vmem:[#allocation3 + $0x10] sm:$0xff]
        %v710 = vld [vmem:[#allocation3 + $0x18] sm:$0xff]
        %v711 = vld [vmem:[#allocation3 + $0x20] sm:$0xff]
        %v712 = vld [vmem:[#allocation3 + $0x28] sm:$0xff]
        %v713 = vld [vmem:[#allocation3 + $0x30] sm:$0xff]
        %v714 = vld [vmem:[#allocation3 + $0x38] sm:$0xff]
        %v715 = vld [vmem:[#allocation3 + $0x40] sm:$0xff]
        %v716 = vld [vmem:[#allocation3 + $0x48] sm:$0xff]
        %v717 = vld [vmem:[#allocation3 + $0x50] sm:$0xff]
        %v718 = vld [vmem:[#allocation3 + $0x58] sm:$0xff]
        %v719 = vld [vmem:[#allocation3 + $0x60] sm:$0xff]
        %v720 = vld [vmem:[#allocation3 + $0x68] sm:$0xff]
        %v721 = vld [vmem:[#allocation3 + $0x70] sm:$0xff]
        %v722 = vld [vmem:[#allocation3 + $0x78] sm:$0xff]
        %v723 = vld [vmem:[#allocation3 + $0x80] sm:$0xff]
        %v724 = vld [vmem:[#allocation3 + $0x88] sm:$0xff]
        %v725 = vld [vmem:[#allocation3 + $0x90] sm:$0xff]
        %v726 = vld [vmem:[#allocation3 + $0x98] sm:$0xff]
        %v727 = vld [vmem:[#allocation3 + $0xa0] sm:$0xff]
        %v728 = vld [vmem:[#allocation3 + $0xa8] sm:$0xff]
        %v729 = vld [vmem:[#allocation3 + $0xb0] sm:$0xff]
        %v730 = vld [vmem:[#allocation3 + $0xb8] sm:$0xff]
        %v731 = vld [vmem:[#allocation3 + $0xc0] sm:$0xff]
        %v732 = vld [vmem:[#allocation3 + $0xc8] sm:$0xff]
        %v733 = vld [vmem:[#allocation3 + $0xd0] sm:$0xff]
        %v734 = vld [vmem:[#allocation3 + $0xd8] sm:$0xff]
        %v735 = vld [vmem:[#allocation3 + $0xe0] sm:$0xff]
        %v736 = vld [vmem:[#allocation3 + $0xe8] sm:$0xff]
        %v737 = vld [vmem:[#allocation3 + $0xf0] sm:$0xff]
        %v738 = vld [vmem:[#allocation3 + $0xf8] sm:$0xff]
        %v739 = vld [vmem:[#allocation3 + $0x100] sm:$0xff]
        %v740 = vld [vmem:[#allocation3 + $0x108] sm:$0xff]
        %v741 = vld [vmem:[#allocation3 + $0x110] sm:$0xff]
        %v742 = vld [vmem:[#allocation3 + $0x118] sm:$0xff]
        %v743 = vld [vmem:[#allocation3 + $0x120] sm:$0xff]
        %v744 = vld [vmem:[#allocation3 + $0x128] sm:$0xff]
        %v745 = vld [vmem:[#allocation3 + $0x130] sm:$0xff]
        %v746 = vld [vmem:[#allocation3 + $0x138] sm:$0xff]
        %v747 = vld [vmem:[#allocation3 + $0x140] sm:$0xff]
        %v748 = vld [vmem:[#allocation3 + $0x148] sm:$0xff]
        %v749 = vld [vmem:[#allocation3 + $0x150] sm:$0xff]
        %v750 = vld [vmem:[#allocation3 + $0x158] sm:$0xff]
        %v751 = vld [vmem:[#allocation3 + $0x160] sm:$0xff]
        %v752 = vld [vmem:[#allocation3 + $0x168] sm:$0xff]
        %v753 = vld [vmem:[#allocation3 + $0x170] sm:$0xff]
        %v754 = vld [vmem:[#allocation3 + $0x178] sm:$0xff]
        %v755 = vld [vmem:[#allocation3 + $0x180] sm:$0xff]
        %v756 = vld [vmem:[#allocation3 + $0x188] sm:$0xff]
        %v757 = vld [vmem:[#allocation3 + $0x190] sm:$0xff]
        %v758 = vld [vmem:[#allocation3 + $0x198] sm:$0xff]
        %v759 = vld [vmem:[#allocation3 + $0x1a0] sm:$0xff]
        %v760 = vld [vmem:[#allocation3 + $0x1a8] sm:$0xff]
        %v761 = vld [vmem:[#allocation3 + $0x1b0] sm:$0xff]
        %v762 = vld [vmem:[#allocation3 + $0x1b8] sm:$0xff]
        %v763 = vld [vmem:[#allocation3 + $0x1c0] sm:$0xff]
        %v764 = vld [vmem:[#allocation3 + $0x1c8] sm:$0xff]
        %v765 = vld [vmem:[#allocation3 + $0x1d0] sm:$0xff]
        %v766 = vld [vmem:[#allocation3 + $0x1d8] sm:$0xff]
        %v767 = vld [vmem:[#allocation3 + $0x1e0] sm:$0xff]
        %v768 = vld [vmem:[#allocation3 + $0x1e8] sm:$0xff]
        %v769 = vld [vmem:[#allocation3 + $0x1f0] sm:$0xff]
        %v770 = vld [vmem:[#allocation3 + $0x1f8] sm:$0xff]
        %v771 = vld [vmem:[%s408] sm:$0xff]
        %v772 = vld [vmem:[%s412] sm:$0xff]
        %773 = vmatprep.subr.mxu0 %v768
        %774 = vmatpush1.msra.mxu0 %v767
        %775 = vmatprep.subr.mxu0 %v764
        %776 = vmatpush1.msra.mxu0 %v763
        %777 = vmatprep.subr.mxu0 %v760
        %778 = vmatpush1.msra.mxu0 %v759
        %779 = vmatprep.subr.mxu0 %v756
        %780 = vmatpush1.msra.mxu0 %v755
        %781 = vmatprep.subr.mxu0 %v752
        %782 = vmatpush1.msra.mxu0 %v751
        %783 = vmatprep.subr.mxu0 %v748
        %784 = vmatpush1.msra.mxu0 %v747
        %785 = vmatprep.subr.mxu0 %v744
        %786 = vmatpush1.msra.mxu0 %v743
        %787 = vmatprep.subr.mxu0 %v740
        %788 = vmatpush1.msra.mxu0 %v739
        %789 = vmatprep.subr.mxu0 %v736
        %790 = vmatpush1.msra.mxu0 %v735
        %791 = vmatprep.subr.mxu0 %v732
        %792 = vmatpush1.msra.mxu0 %v731
        %793 = vmatprep.subr.mxu0 %v728
        %794 = vmatpush1.msra.mxu0 %v727
        %795 = vmatprep.subr.mxu0 %v724
        %796 = vmatpush1.msra.mxu0 %v723
        %797 = vmatprep.subr.mxu0 %v720
        %798 = vmatpush1.msra.mxu0 %v719
        %799 = vmatprep.subr.mxu0 %v716
        %800 = vmatpush1.msra.mxu0 %v715
        %801 = vmatprep.subr.mxu0 %v712
        %802 = vmatpush1.msra.mxu0 %v711
        %803 = vmatprep.subr.mxu0 %v708
        %804 = vmatpush1.msra.mxu0 %v707
        %805 = vmatprep.subr.mxu0 0.0
        %806 = vmatpush2.msra.mxu0 0.0
        %807 = vmatprep.subr.mxu0 0.0
        %808 = vmatpush2.msra.mxu0 0.0
        %809 = vmatprep.subr.mxu0 0.0
        %810 = vmatpush2.msra.mxu0 0.0
        %811 = vmatprep.subr.mxu0 0.0
        %812 = vmatpush2.msra.mxu0 0.0
        %813 = vmatprep.subr.mxu0 0.0
        %814 = vmatpush2.msra.mxu0 0.0
        %815 = vmatprep.subr.mxu0 0.0
        %816 = vmatpush2.msra.mxu0 0.0
        %817 = vmatprep.subr.mxu0 0.0
        %818 = vmatpush2.msra.mxu0 0.0
        %819 = vmatprep.subr.mxu0 0.0
        %820 = vmatpush2.msra.mxu0 0.0
        %821 = vmatprep.subr.mxu0 0.0
        %822 = vmatpush2.msra.mxu0 0.0
        %823 = vmatprep.subr.mxu0 0.0
        %824 = vmatpush2.msra.mxu0 0.0
        %825 = vmatprep.subr.mxu0 0.0
        %826 = vmatpush2.msra.mxu0 0.0
        %827 = vmatprep.subr.mxu0 0.0
        %828 = vmatpush2.msra.mxu0 0.0
        %829 = vmatprep.subr.mxu0 0.0
        %830 = vmatpush2.msra.mxu0 0.0
        %831 = vmatprep.subr.mxu0 0.0
        %832 = vmatpush2.msra.mxu0 0.0
        %833 = vmatprep.subr.mxu0 0.0
        %834 = vmatpush2.msra.mxu0 0.0
        %835 = vmatprep.subr.mxu0 0.0
        %836 = vmatpush2.msra.mxu0 0.0
        %837 = vmatprep.mubr.f32.mxu0 0.0
        %838 = vmatmul.mubr.f32.gmra.mxu0 %v771
        %v839 = vpop.f32.mrf.mxu0
        %v840 = vadd.f32 0.0, %v839
        %v841 = vpop.f32.mrf.mxu0
        %v842 = vadd.f32 0.0, %v841
        %843 = vdwg.mxu0
        %844 = vmatprep.subr.mxu0 %v770
        %845 = vmatpush1.msra.mxu0 %v769
        %846 = vmatprep.subr.mxu0 %v766
        %847 = vmatpush1.msra.mxu0 %v765
        %848 = vmatprep.subr.mxu0 %v762
        %849 = vmatpush1.msra.mxu0 %v761
        %850 = vmatprep.subr.mxu0 %v758
        %851 = vmatpush1.msra.mxu0 %v757
        %852 = vmatprep.subr.mxu0 %v754
        %853 = vmatpush1.msra.mxu0 %v753
        %854 = vmatprep.subr.mxu0 %v750
        %855 = vmatpush1.msra.mxu0 %v749
        %856 = vmatprep.subr.mxu0 %v746
        %857 = vmatpush1.msra.mxu0 %v745
        %858 = vmatprep.subr.mxu0 %v742
        %859 = vmatpush1.msra.mxu0 %v741
        %860 = vmatprep.subr.mxu0 %v738
        %861 = vmatpush1.msra.mxu0 %v737
        %862 = vmatprep.subr.mxu0 %v734
        %863 = vmatpush1.msra.mxu0 %v733
        %864 = vmatprep.subr.mxu0 %v730
        %865 = vmatpush1.msra.mxu0 %v729
        %866 = vmatprep.subr.mxu0 %v726
        %867 = vmatpush1.msra.mxu0 %v725
        %868 = vmatprep.subr.mxu0 %v722
        %869 = vmatpush1.msra.mxu0 %v721
        %870 = vmatprep.subr.mxu0 %v718
        %871 = vmatpush1.msra.mxu0 %v717
        %872 = vmatprep.subr.mxu0 %v714
        %873 = vmatpush1.msra.mxu0 %v713
        %874 = vmatprep.subr.mxu0 %v710
        %875 = vmatpush1.msra.mxu0 %v709
        %876 = vmatprep.subr.mxu0 0.0
        %877 = vmatpush2.msra.mxu0 0.0
        %878 = vmatprep.subr.mxu0 0.0
        %879 = vmatpush2.msra.mxu0 0.0
        %880 = vmatprep.subr.mxu0 0.0
        %881 = vmatpush2.msra.mxu0 0.0
        %882 = vmatprep.subr.mxu0 0.0
        %883 = vmatpush2.msra.mxu0 0.0
        %884 = vmatprep.subr.mxu0 0.0
        %885 = vmatpush2.msra.mxu0 0.0
        %886 = vmatprep.subr.mxu0 0.0
        %887 = vmatpush2.msra.mxu0 0.0
        %888 = vmatprep.subr.mxu0 0.0
        %889 = vmatpush2.msra.mxu0 0.0
        %890 = vmatprep.subr.mxu0 0.0
        %891 = vmatpush2.msra.mxu0 0.0
        %892 = vmatprep.subr.mxu0 0.0
        %893 = vmatpush2.msra.mxu0 0.0
        %894 = vmatprep.subr.mxu0 0.0
        %895 = vmatpush2.msra.mxu0 0.0
        %896 = vmatprep.subr.mxu0 0.0
        %897 = vmatpush2.msra.mxu0 0.0
        %898 = vmatprep.subr.mxu0 0.0
        %899 = vmatpush2.msra.mxu0 0.0
        %900 = vmatprep.subr.mxu0 0.0
        %901 = vmatpush2.msra.mxu0 0.0
        %902 = vmatprep.subr.mxu0 0.0
        %903 = vmatpush2.msra.mxu0 0.0
        %904 = vmatprep.subr.mxu0 0.0
        %905 = vmatpush2.msra.mxu0 0.0
        %906 = vmatprep.subr.mxu0 0.0
        %907 = vmatpush2.msra.mxu0 0.0
        %908 = vmatprep.mubr.f32.mxu0 0.0
        %909 = vmatmul.mubr.f32.gmra.mxu0 %v771
        %v910 = vpop.f32.mrf.mxu0
        %v911 = vadd.f32 0.0, %v910
        %v912 = vpop.f32.mrf.mxu0
        %v913 = vadd.f32 0.0, %v912
        %914 = vdwg.mxu0
        %v915 = vadd.f32 %v548, %v840
        %v916 = vadd.f32 %v550, %v842
        %v917 = vadd.f32 %v661, %v911
        %v918 = vadd.f32 %v663, %v913
        %v919 = vxor.u32 %v915, 2147483648
        %v920 = vmul.f32 %v919, 1.442695
        %v921 = vpow.pop %v920
        %v922 = vadd.f32 %v921, 1.0
        %v923 = vrcp.pop %v922
        %v924 = vmul.f32 1.0, %v923
        %v925 = vxor.u32 %v916, 2147483648
        %v926 = vmul.f32 %v925, 1.442695
        %v927 = vpow.pop %v926
        %v928 = vadd.f32 %v927, 1.0
        %v929 = vrcp.pop %v928
        %v930 = vmul.f32 1.0, %v929
        %v931 = vtanh.pop %v917
        %v932 = vxor.u32 %v918, 2147483648
        %v933 = vmul.f32 %v932, 1.442695
        %v934 = vpow.pop %v933
        %v935 = vadd.f32 %v934, 1.0
        %v936 = vrcp.pop %v935
        %v937 = vmul.f32 1.0, %v936
        %v938 = vmul.f32 %v930, %v772
        %v939 = vmul.f32 %v924, %v931
        %v940 = vadd.f32 %v938, %v939
        %v941 = vtanh.pop %v940
        %v942 = vmul.f32 %v937, %v941
        %943 = vmatprep.subr.mxu0 %v768
        %944 = vmatpush1.msra.mxu0 %v767
        %945 = vmatprep.subr.mxu0 %v764
        %946 = vmatpush1.msra.mxu0 %v763
        %947 = vmatprep.subr.mxu0 %v760
        %948 = vmatpush1.msra.mxu0 %v759
        %949 = vmatprep.subr.mxu0 %v756
        %950 = vmatpush1.msra.mxu0 %v755
        %951 = vmatprep.subr.mxu0 %v752
        %952 = vmatpush1.msra.mxu0 %v751
        %953 = vmatprep.subr.mxu0 %v748
        %954 = vmatpush1.msra.mxu0 %v747
        %955 = vmatprep.subr.mxu0 %v744
        %956 = vmatpush1.msra.mxu0 %v743
        %957 = vmatprep.subr.mxu0 %v740
        %958 = vmatpush1.msra.mxu0 %v739
        %959 = vmatprep.subr.mxu0 %v736
        %960 = vmatpush1.msra.mxu0 %v735
        %961 = vmatprep.subr.mxu0 %v732
        %962 = vmatpush1.msra.mxu0 %v731
        %963 = vmatprep.subr.mxu0 %v728
        %964 = vmatpush1.msra.mxu0 %v727
        %965 = vmatprep.subr.mxu0 %v724
        %966 = vmatpush1.msra.mxu0 %v723
        %967 = vmatprep.subr.mxu0 %v720
        %968 = vmatpush1.msra.mxu0 %v719
        %969 = vmatprep.subr.mxu0 %v716
        %970 = vmatpush1.msra.mxu0 %v715
        %971 = vmatprep.subr.mxu0 %v712
        %972 = vmatpush1.msra.mxu0 %v711
        %973 = vmatprep.subr.mxu0 %v708
        %974 = vmatpush1.msra.mxu0 %v707
        %975 = vmatprep.subr.mxu0 0.0
        %976 = vmatpush2.msra.mxu0 0.0
        %977 = vmatprep.subr.mxu0 0.0
        %978 = vmatpush2.msra.mxu0 0.0
        %979 = vmatprep.subr.mxu0 0.0
        %980 = vmatpush2.msra.mxu0 0.0
        %981 = vmatprep.subr.mxu0 0.0
        %982 = vmatpush2.msra.mxu0 0.0
        %983 = vmatprep.subr.mxu0 0.0
        %984 = vmatpush2.msra.mxu0 0.0
        %985 = vmatprep.subr.mxu0 0.0
        %986 = vmatpush2.msra.mxu0 0.0
        %987 = vmatprep.subr.mxu0 0.0
        %988 = vmatpush2.msra.mxu0 0.0
        %989 = vmatprep.subr.mxu0 0.0
        %990 = vmatpush2.msra.mxu0 0.0
        %991 = vmatprep.subr.mxu0 0.0
        %992 = vmatpush2.msra.mxu0 0.0
        %993 = vmatprep.subr.mxu0 0.0
        %994 = vmatpush2.msra.mxu0 0.0
        %995 = vmatprep.subr.mxu0 0.0
        %996 = vmatpush2.msra.mxu0 0.0
        %997 = vmatprep.subr.mxu0 0.0
        %998 = vmatpush2.msra.mxu0 0.0
        %999 = vmatprep.subr.mxu0 0.0
        %1000 = vmatpush2.msra.mxu0 0.0
        %1001 = vmatprep.subr.mxu0 0.0
        %1002 = vmatpush2.msra.mxu0 0.0
        %1003 = vmatprep.subr.mxu0 0.0
        %1004 = vmatpush2.msra.mxu0 0.0
        %1005 = vmatprep.subr.mxu0 0.0
        %1006 = vmatpush2.msra.mxu0 0.0
        %1007 = vmatprep.mubr.f32.mxu0 0.0
        %1008 = vmatmul.mubr.f32.gmra.mxu0 %v942
        %v1009 = vpop.f32.mrf.mxu0
        %v1010 = vadd.f32 0.0, %v1009
        %v1011 = vpop.f32.mrf.mxu0
        %v1012 = vadd.f32 0.0, %v1011
        %1013 = vdwg.mxu0
        %1014 = vmatprep.subr.mxu0 %v770
        %1015 = vmatpush1.msra.mxu0 %v769
        %1016 = vmatprep.subr.mxu0 %v766
        %1017 = vmatpush1.msra.mxu0 %v765
        %1018 = vmatprep.subr.mxu0 %v762
        %1019 = vmatpush1.msra.mxu0 %v761
        %1020 = vmatprep.subr.mxu0 %v758
        %1021 = vmatpush1.msra.mxu0 %v757
        %1022 = vmatprep.subr.mxu0 %v754
        %1023 = vmatpush1.msra.mxu0 %v753
        %1024 = vmatprep.subr.mxu0 %v750
        %1025 = vmatpush1.msra.mxu0 %v749
        %1026 = vmatprep.subr.mxu0 %v746
        %1027 = vmatpush1.msra.mxu0 %v745
        %1028 = vmatprep.subr.mxu0 %v742
        %1029 = vmatpush1.msra.mxu0 %v741
        %1030 = vmatprep.subr.mxu0 %v738
        %1031 = vmatpush1.msra.mxu0 %v737
        %1032 = vmatprep.subr.mxu0 %v734
        %1033 = vmatpush1.msra.mxu0 %v733
        %1034 = vmatprep.subr.mxu0 %v730
        %1035 = vmatpush1.msra.mxu0 %v729
        %1036 = vmatprep.subr.mxu0 %v726
        %1037 = vmatpush1.msra.mxu0 %v725
        %1038 = vmatprep.subr.mxu0 %v722
        %1039 = vmatpush1.msra.mxu0 %v721
        %1040 = vmatprep.subr.mxu0 %v718
        %1041 = vmatpush1.msra.mxu0 %v717
        %1042 = vmatprep.subr.mxu0 %v714
        %1043 = vmatpush1.msra.mxu0 %v713
        %1044 = vmatprep.subr.mxu0 %v710
        %1045 = vmatpush1.msra.mxu0 %v709
        %1046 = vmatprep.subr.mxu0 0.0
        %1047 = vmatpush2.msra.mxu0 0.0
        %1048 = vmatprep.subr.mxu0 0.0
        %1049 = vmatpush2.msra.mxu0 0.0
        %1050 = vmatprep.subr.mxu0 0.0
        %1051 = vmatpush2.msra.mxu0 0.0
        %1052 = vmatprep.subr.mxu0 0.0
        %1053 = vmatpush2.msra.mxu0 0.0
        %1054 = vmatprep.subr.mxu0 0.0
        %1055 = vmatpush2.msra.mxu0 0.0
        %1056 = vmatprep.subr.mxu0 0.0
        %1057 = vmatpush2.msra.mxu0 0.0
        %1058 = vmatprep.subr.mxu0 0.0
        %1059 = vmatpush2.msra.mxu0 0.0
        %1060 = vmatprep.subr.mxu0 0.0
        %1061 = vmatpush2.msra.mxu0 0.0
        %1062 = vmatprep.subr.mxu0 0.0
        %1063 = vmatpush2.msra.mxu0 0.0
        %1064 = vmatprep.subr.mxu0 0.0
        %1065 = vmatpush2.msra.mxu0 0.0
        %1066 = vmatprep.subr.mxu0 0.0
        %1067 = vmatpush2.msra.mxu0 0.0
        %1068 = vmatprep.subr.mxu0 0.0
        %1069 = vmatpush2.msra.mxu0 0.0
        %1070 = vmatprep.subr.mxu0 0.0
        %1071 = vmatpush2.msra.mxu0 0.0
        %1072 = vmatprep.subr.mxu0 0.0
        %1073 = vmatpush2.msra.mxu0 0.0
        %1074 = vmatprep.subr.mxu0 0.0
        %1075 = vmatpush2.msra.mxu0 0.0
        %1076 = vmatprep.subr.mxu0 0.0
        %1077 = vmatpush2.msra.mxu0 0.0
        %1078 = vmatprep.mubr.f32.mxu0 0.0
        %1079 = vmatmul.mubr.f32.gmra.mxu0 %v942
        %v1080 = vpop.f32.mrf.mxu0
        %v1081 = vadd.f32 0.0, %v1080
        %v1082 = vpop.f32.mrf.mxu0
        %v1083 = vadd.f32 0.0, %v1082
        %1084 = vdwg.mxu0
        %v1085 = vadd.f32 %v554, %v1010
        %v1086 = vadd.f32 %v556, %v1012
        %v1087 = vadd.f32 %v667, %v1081
        %v1088 = vadd.f32 %v669, %v1083
        %v1089 = vxor.u32 %v1085, 2147483648
        %v1090 = vmul.f32 %v1089, 1.442695
        %v1091 = vpow.pop %v1090
        %v1092 = vadd.f32 %v1091, 1.0
        %v1093 = vrcp.pop %v1092
        %v1094 = vmul.f32 1.0, %v1093
        %v1095 = vxor.u32 %v1086, 2147483648
        %v1096 = vmul.f32 %v1095, 1.442695
        %v1097 = vpow.pop %v1096
        %v1098 = vadd.f32 %v1097, 1.0
        %v1099 = vrcp.pop %v1098
        %v1100 = vmul.f32 1.0, %v1099
        %v1101 = vtanh.pop %v1087
        %v1102 = vxor.u32 %v1088, 2147483648
        %v1103 = vmul.f32 %v1102, 1.442695
        %v1104 = vpow.pop %v1103
        %v1105 = vadd.f32 %v1104, 1.0
        %v1106 = vrcp.pop %v1105
        %v1107 = vmul.f32 1.0, %v1106
        %v1108 = vmul.f32 %v1100, %v940
        %v1109 = vmul.f32 %v1094, %v1101
        %v1110 = vadd.f32 %v1108, %v1109
        %v1111 = vtanh.pop %v1110
        %v1112 = vmul.f32 %v1107, %v1111
        %1113 = vmatprep.subr.mxu0 %v768
        %1114 = vmatpush1.msra.mxu0 %v767
        %1115 = vmatprep.subr.mxu0 %v764
        %1116 = vmatpush1.msra.mxu0 %v763
        %1117 = vmatprep.subr.mxu0 %v760
        %1118 = vmatpush1.msra.mxu0 %v759
        %1119 = vmatprep.subr.mxu0 %v756
        %1120 = vmatpush1.msra.mxu0 %v755
        %1121 = vmatprep.subr.mxu0 %v752
        %1122 = vmatpush1.msra.mxu0 %v751
        %1123 = vmatprep.subr.mxu0 %v748
        %1124 = vmatpush1.msra.mxu0 %v747
        %1125 = vmatprep.subr.mxu0 %v744
        %1126 = vmatpush1.msra.mxu0 %v743
        %1127 = vmatprep.subr.mxu0 %v740
        %1128 = vmatpush1.msra.mxu0 %v739
        %1129 = vmatprep.subr.mxu0 %v736
        %1130 = vmatpush1.msra.mxu0 %v735
        %1131 = vmatprep.subr.mxu0 %v732
        %1132 = vmatpush1.msra.mxu0 %v731
        %1133 = vmatprep.subr.mxu0 %v728
        %1134 = vmatpush1.msra.mxu0 %v727
        %1135 = vmatprep.subr.mxu0 %v724
        %1136 = vmatpush1.msra.mxu0 %v723
        %1137 = vmatprep.subr.mxu0 %v720
        %1138 = vmatpush1.msra.mxu0 %v719
        %1139 = vmatprep.subr.mxu0 %v716
        %1140 = vmatpush1.msra.mxu0 %v715
        %1141 = vmatprep.subr.mxu0 %v712
        %1142 = vmatpush1.msra.mxu0 %v711
        %1143 = vmatprep.subr.mxu0 %v708
        %1144 = vmatpush1.msra.mxu0 %v707
        %1145 = vmatprep.subr.mxu0 0.0
        %1146 = vmatpush2.msra.mxu0 0.0
        %1147 = vmatprep.subr.mxu0 0.0
        %1148 = vmatpush2.msra.mxu0 0.0
        %1149 = vmatprep.subr.mxu0 0.0
        %1150 = vmatpush2.msra.mxu0 0.0
        %1151 = vmatprep.subr.mxu0 0.0
        %1152 = vmatpush2.msra.mxu0 0.0
        %1153 = vmatprep.subr.mxu0 0.0
        %1154 = vmatpush2.msra.mxu0 0.0
        %1155 = vmatprep.subr.mxu0 0.0
        %1156 = vmatpush2.msra.mxu0 0.0
        %1157 = vmatprep.subr.mxu0 0.0
        %1158 = vmatpush2.msra.mxu0 0.0
        %1159 = vmatprep.subr.mxu0 0.0
        %1160 = vmatpush2.msra.mxu0 0.0
        %1161 = vmatprep.subr.mxu0 0.0
        %1162 = vmatpush2.msra.mxu0 0.0
        %1163 = vmatprep.subr.mxu0 0.0
        %1164 = vmatpush2.msra.mxu0 0.0
        %1165 = vmatprep.subr.mxu0 0.0
        %1166 = vmatpush2.msra.mxu0 0.0
        %1167 = vmatprep.subr.mxu0 0.0
        %1168 = vmatpush2.msra.mxu0 0.0
        %1169 = vmatprep.subr.mxu0 0.0
        %1170 = vmatpush2.msra.mxu0 0.0
        %1171 = vmatprep.subr.mxu0 0.0
        %1172 = vmatpush2.msra.mxu0 0.0
        %1173 = vmatprep.subr.mxu0 0.0
        %1174 = vmatpush2.msra.mxu0 0.0
        %1175 = vmatprep.subr.mxu0 0.0
        %1176 = vmatpush2.msra.mxu0 0.0
        %1177 = vmatprep.mubr.f32.mxu0 0.0
        %1178 = vmatmul.mubr.f32.gmra.mxu0 %v1112
        %v1179 = vpop.f32.mrf.mxu0
        %v1180 = vadd.f32 0.0, %v1179
        %v1181 = vpop.f32.mrf.mxu0
        %v1182 = vadd.f32 0.0, %v1181
        %1183 = vdwg.mxu0
        %1184 = vmatprep.subr.mxu0 %v770
        %1185 = vmatpush1.msra.mxu0 %v769
        %1186 = vmatprep.subr.mxu0 %v766
        %1187 = vmatpush1.msra.mxu0 %v765
        %1188 = vmatprep.subr.mxu0 %v762
        %1189 = vmatpush1.msra.mxu0 %v761
        %1190 = vmatprep.subr.mxu0 %v758
        %1191 = vmatpush1.msra.mxu0 %v757
        %1192 = vmatprep.subr.mxu0 %v754
        %1193 = vmatpush1.msra.mxu0 %v753
        %1194 = vmatprep.subr.mxu0 %v750
        %1195 = vmatpush1.msra.mxu0 %v749
        %1196 = vmatprep.subr.mxu0 %v746
        %1197 = vmatpush1.msra.mxu0 %v745
        %1198 = vmatprep.subr.mxu0 %v742
        %1199 = vmatpush1.msra.mxu0 %v741
        %1200 = vmatprep.subr.mxu0 %v738
        %1201 = vmatpush1.msra.mxu0 %v737
        %1202 = vmatprep.subr.mxu0 %v734
        %1203 = vmatpush1.msra.mxu0 %v733
        %1204 = vmatprep.subr.mxu0 %v730
        %1205 = vmatpush1.msra.mxu0 %v729
        %1206 = vmatprep.subr.mxu0 %v726
        %1207 = vmatpush1.msra.mxu0 %v725
        %1208 = vmatprep.subr.mxu0 %v722
        %1209 = vmatpush1.msra.mxu0 %v721
        %1210 = vmatprep.subr.mxu0 %v718
        %1211 = vmatpush1.msra.mxu0 %v717
        %1212 = vmatprep.subr.mxu0 %v714
        %1213 = vmatpush1.msra.mxu0 %v713
        %1214 = vmatprep.subr.mxu0 %v710
        %1215 = vmatpush1.msra.mxu0 %v709
        %1216 = vmatprep.subr.mxu0 0.0
        %1217 = vmatpush2.msra.mxu0 0.0
        %1218 = vmatprep.subr.mxu0 0.0
        %1219 = vmatpush2.msra.mxu0 0.0
        %1220 = vmatprep.subr.mxu0 0.0
        %1221 = vmatpush2.msra.mxu0 0.0
        %1222 = vmatprep.subr.mxu0 0.0
        %1223 = vmatpush2.msra.mxu0 0.0
        %1224 = vmatprep.subr.mxu0 0.0
        %1225 = vmatpush2.msra.mxu0 0.0
        %1226 = vmatprep.subr.mxu0 0.0
        %1227 = vmatpush2.msra.mxu0 0.0
        %1228 = vmatprep.subr.mxu0 0.0
        %1229 = vmatpush2.msra.mxu0 0.0
        %1230 = vmatprep.subr.mxu0 0.0
        %1231 = vmatpush2.msra.mxu0 0.0
        %1232 = vmatprep.subr.mxu0 0.0
        %1233 = vmatpush2.msra.mxu0 0.0
        %1234 = vmatprep.subr.mxu0 0.0
        %1235 = vmatpush2.msra.mxu0 0.0
        %1236 = vmatprep.subr.mxu0 0.0
        %1237 = vmatpush2.msra.mxu0 0.0
        %1238 = vmatprep.subr.mxu0 0.0
        %1239 = vmatpush2.msra.mxu0 0.0
        %1240 = vmatprep.subr.mxu0 0.0
        %1241 = vmatpush2.msra.mxu0 0.0
        %1242 = vmatprep.subr.mxu0 0.0
        %1243 = vmatpush2.msra.mxu0 0.0
        %1244 = vmatprep.subr.mxu0 0.0
        %1245 = vmatpush2.msra.mxu0 0.0
        %1246 = vmatprep.subr.mxu0 0.0
        %1247 = vmatpush2.msra.mxu0 0.0
        %1248 = vmatprep.mubr.f32.mxu0 0.0
        %1249 = vmatmul.mubr.f32.gmra.mxu0 %v1112
        %v1250 = vpop.f32.mrf.mxu0
        %v1251 = vadd.f32 0.0, %v1250
        %v1252 = vpop.f32.mrf.mxu0
        %v1253 = vadd.f32 0.0, %v1252
        %1254 = vdwg.mxu0
        %v1255 = vadd.f32 %v560, %v1180
        %v1256 = vadd.f32 %v562, %v1182
        %v1257 = vadd.f32 %v673, %v1251
        %v1258 = vadd.f32 %v675, %v1253
        %v1259 = vxor.u32 %v1255, 2147483648
        %v1260 = vmul.f32 %v1259, 1.442695
        %v1261 = vpow.pop %v1260
        %v1262 = vadd.f32 %v1261, 1.0
        %v1263 = vrcp.pop %v1262
        %v1264 = vmul.f32 1.0, %v1263
        %v1265 = vxor.u32 %v1256, 2147483648
        %v1266 = vmul.f32 %v1265, 1.442695
        %v1267 = vpow.pop %v1266
        %v1268 = vadd.f32 %v1267, 1.0
        %v1269 = vrcp.pop %v1268
        %v1270 = vmul.f32 1.0, %v1269
        %v1271 = vtanh.pop %v1257
        %v1272 = vxor.u32 %v1258, 2147483648
        %v1273 = vmul.f32 %v1272, 1.442695
        %v1274 = vpow.pop %v1273
        %v1275 = vadd.f32 %v1274, 1.0
        %v1276 = vrcp.pop %v1275
        %v1277 = vmul.f32 1.0, %v1276
        %v1278 = vmul.f32 %v1270, %v1110
        %v1279 = vmul.f32 %v1264, %v1271
        %v1280 = vadd.f32 %v1278, %v1279
        %v1281 = vtanh.pop %v1280
        %v1282 = vmul.f32 %v1277, %v1281
        %1283 = vmatprep.subr.mxu0 %v768
        %1284 = vmatpush1.msra.mxu0 %v767
        %1285 = vmatprep.subr.mxu0 %v764
        %1286 = vmatpush1.msra.mxu0 %v763
        %1287 = vmatprep.subr.mxu0 %v760
        %1288 = vmatpush1.msra.mxu0 %v759
        %1289 = vmatprep.subr.mxu0 %v756
        %1290 = vmatpush1.msra.mxu0 %v755
        %1291 = vmatprep.subr.mxu0 %v752
        %1292 = vmatpush1.msra.mxu0 %v751
        %1293 = vmatprep.subr.mxu0 %v748
        %1294 = vmatpush1.msra.mxu0 %v747
        %1295 = vmatprep.subr.mxu0 %v744
        %1296 = vmatpush1.msra.mxu0 %v743
        %1297 = vmatprep.subr.mxu0 %v740
        %1298 = vmatpush1.msra.mxu0 %v739
        %1299 = vmatprep.subr.mxu0 %v736
        %1300 = vmatpush1.msra.mxu0 %v735
        %1301 = vmatprep.subr.mxu0 %v732
        %1302 = vmatpush1.msra.mxu0 %v731
        %1303 = vmatprep.subr.mxu0 %v728
        %1304 = vmatpush1.msra.mxu0 %v727
        %1305 = vmatprep.subr.mxu0 %v724
        %1306 = vmatpush1.msra.mxu0 %v723
        %1307 = vmatprep.subr.mxu0 %v720
        %1308 = vmatpush1.msra.mxu0 %v719
        %1309 = vmatprep.subr.mxu0 %v716
        %1310 = vmatpush1.msra.mxu0 %v715
        %1311 = vmatprep.subr.mxu0 %v712
        %1312 = vmatpush1.msra.mxu0 %v711
        %1313 = vmatprep.subr.mxu0 %v708
        %1314 = vmatpush1.msra.mxu0 %v707
        %1315 = vmatprep.subr.mxu0 0.0
        %1316 = vmatpush2.msra.mxu0 0.0
        %1317 = vmatprep.subr.mxu0 0.0
        %1318 = vmatpush2.msra.mxu0 0.0
        %1319 = vmatprep.subr.mxu0 0.0
        %1320 = vmatpush2.msra.mxu0 0.0
        %1321 = vmatprep.subr.mxu0 0.0
        %1322 = vmatpush2.msra.mxu0 0.0
        %1323 = vmatprep.subr.mxu0 0.0
        %1324 = vmatpush2.msra.mxu0 0.0
        %1325 = vmatprep.subr.mxu0 0.0
        %1326 = vmatpush2.msra.mxu0 0.0
        %1327 = vmatprep.subr.mxu0 0.0
        %1328 = vmatpush2.msra.mxu0 0.0
        %1329 = vmatprep.subr.mxu0 0.0
        %1330 = vmatpush2.msra.mxu0 0.0
        %1331 = vmatprep.subr.mxu0 0.0
        %1332 = vmatpush2.msra.mxu0 0.0
        %1333 = vmatprep.subr.mxu0 0.0
        %1334 = vmatpush2.msra.mxu0 0.0
        %1335 = vmatprep.subr.mxu0 0.0
        %1336 = vmatpush2.msra.mxu0 0.0
        %1337 = vmatprep.subr.mxu0 0.0
        %1338 = vmatpush2.msra.mxu0 0.0
        %1339 = vmatprep.subr.mxu0 0.0
        %1340 = vmatpush2.msra.mxu0 0.0
        %1341 = vmatprep.subr.mxu0 0.0
        %1342 = vmatpush2.msra.mxu0 0.0
        %1343 = vmatprep.subr.mxu0 0.0
        %1344 = vmatpush2.msra.mxu0 0.0
        %1345 = vmatprep.subr.mxu0 0.0
        %1346 = vmatpush2.msra.mxu0 0.0
        %1347 = vmatprep.mubr.f32.mxu0 0.0
        %1348 = vmatmul.mubr.f32.gmra.mxu0 %v1282
        %v1349 = vpop.f32.mrf.mxu0
        %v1350 = vadd.f32 0.0, %v1349
        %v1351 = vpop.f32.mrf.mxu0
        %v1352 = vadd.f32 0.0, %v1351
        %1353 = vdwg.mxu0
        %1354 = vmatprep.subr.mxu0 %v770
        %1355 = vmatpush1.msra.mxu0 %v769
        %1356 = vmatprep.subr.mxu0 %v766
        %1357 = vmatpush1.msra.mxu0 %v765
        %1358 = vmatprep.subr.mxu0 %v762
        %1359 = vmatpush1.msra.mxu0 %v761
        %1360 = vmatprep.subr.mxu0 %v758
        %1361 = vmatpush1.msra.mxu0 %v757
        %1362 = vmatprep.subr.mxu0 %v754
        %1363 = vmatpush1.msra.mxu0 %v753
        %1364 = vmatprep.subr.mxu0 %v750
        %1365 = vmatpush1.msra.mxu0 %v749
        %1366 = vmatprep.subr.mxu0 %v746
        %1367 = vmatpush1.msra.mxu0 %v745
        %1368 = vmatprep.subr.mxu0 %v742
        %1369 = vmatpush1.msra.mxu0 %v741
        %1370 = vmatprep.subr.mxu0 %v738
        %1371 = vmatpush1.msra.mxu0 %v737
        %1372 = vmatprep.subr.mxu0 %v734
        %1373 = vmatpush1.msra.mxu0 %v733
        %1374 = vmatprep.subr.mxu0 %v730
        %1375 = vmatpush1.msra.mxu0 %v729
        %1376 = vmatprep.subr.mxu0 %v726
        %1377 = vmatpush1.msra.mxu0 %v725
        %1378 = vmatprep.subr.mxu0 %v722
        %1379 = vmatpush1.msra.mxu0 %v721
        %1380 = vmatprep.subr.mxu0 %v718
        %1381 = vmatpush1.msra.mxu0 %v717
        %1382 = vmatprep.subr.mxu0 %v714
        %1383 = vmatpush1.msra.mxu0 %v713
        %1384 = vmatprep.subr.mxu0 %v710
        %1385 = vmatpush1.msra.mxu0 %v709
        %1386 = vmatprep.subr.mxu0 0.0
        %1387 = vmatpush2.msra.mxu0 0.0
        %1388 = vmatprep.subr.mxu0 0.0
        %1389 = vmatpush2.msra.mxu0 0.0
        %1390 = vmatprep.subr.mxu0 0.0
        %1391 = vmatpush2.msra.mxu0 0.0
        %1392 = vmatprep.subr.mxu0 0.0
        %1393 = vmatpush2.msra.mxu0 0.0
        %1394 = vmatprep.subr.mxu0 0.0
        %1395 = vmatpush2.msra.mxu0 0.0
        %1396 = vmatprep.subr.mxu0 0.0
        %1397 = vmatpush2.msra.mxu0 0.0
        %1398 = vmatprep.subr.mxu0 0.0
        %1399 = vmatpush2.msra.mxu0 0.0
        %1400 = vmatprep.subr.mxu0 0.0
        %1401 = vmatpush2.msra.mxu0 0.0
        %1402 = vmatprep.subr.mxu0 0.0
        %1403 = vmatpush2.msra.mxu0 0.0
        %1404 = vmatprep.subr.mxu0 0.0
        %1405 = vmatpush2.msra.mxu0 0.0
        %1406 = vmatprep.subr.mxu0 0.0
        %1407 = vmatpush2.msra.mxu0 0.0
        %1408 = vmatprep.subr.mxu0 0.0
        %1409 = vmatpush2.msra.mxu0 0.0
        %1410 = vmatprep.subr.mxu0 0.0
        %1411 = vmatpush2.msra.mxu0 0.0
        %1412 = vmatprep.subr.mxu0 0.0
        %1413 = vmatpush2.msra.mxu0 0.0
        %1414 = vmatprep.subr.mxu0 0.0
        %1415 = vmatpush2.msra.mxu0 0.0
        %1416 = vmatprep.subr.mxu0 0.0
        %1417 = vmatpush2.msra.mxu0 0.0
        %1418 = vmatprep.mubr.f32.mxu0 0.0
        %1419 = vmatmul.mubr.f32.gmra.mxu0 %v1282
        %v1420 = vpop.f32.mrf.mxu0
        %v1421 = vadd.f32 0.0, %v1420
        %v1422 = vpop.f32.mrf.mxu0
        %v1423 = vadd.f32 0.0, %v1422
        %1424 = vdwg.mxu0
        %v1425 = vadd.f32 %v566, %v1350
        %v1426 = vadd.f32 %v568, %v1352
        %v1427 = vadd.f32 %v679, %v1421
        %v1428 = vadd.f32 %v681, %v1423
        %v1429 = vxor.u32 %v1425, 2147483648
        %v1430 = vmul.f32 %v1429, 1.442695
        %v1431 = vpow.pop %v1430
        %v1432 = vadd.f32 %v1431, 1.0
        %v1433 = vrcp.pop %v1432
        %v1434 = vmul.f32 1.0, %v1433
        %v1435 = vxor.u32 %v1426, 2147483648
        %v1436 = vmul.f32 %v1435, 1.442695
        %v1437 = vpow.pop %v1436
        %v1438 = vadd.f32 %v1437, 1.0
        %v1439 = vrcp.pop %v1438
        %v1440 = vmul.f32 1.0, %v1439
        %v1441 = vtanh.pop %v1427
        %v1442 = vxor.u32 %v1428, 2147483648
        %v1443 = vmul.f32 %v1442, 1.442695
        %v1444 = vpow.pop %v1443
        %v1445 = vadd.f32 %v1444, 1.0
        %v1446 = vrcp.pop %v1445
        %v1447 = vmul.f32 1.0, %v1446
        %v1448 = vmul.f32 %v1440, %v1280
        %v1449 = vmul.f32 %v1434, %v1441
        %v1450 = vadd.f32 %v1448, %v1449
        %v1451 = vtanh.pop %v1450
        %v1452 = vmul.f32 %v1447, %v1451
        %1453 = vmatprep.subr.mxu0 %v768
        %1454 = vmatpush1.msra.mxu0 %v767
        %1455 = vmatprep.subr.mxu0 %v764
        %1456 = vmatpush1.msra.mxu0 %v763
        %1457 = vmatprep.subr.mxu0 %v760
        %1458 = vmatpush1.msra.mxu0 %v759
        %1459 = vmatprep.subr.mxu0 %v756
        %1460 = vmatpush1.msra.mxu0 %v755
        %1461 = vmatprep.subr.mxu0 %v752
        %1462 = vmatpush1.msra.mxu0 %v751
        %1463 = vmatprep.subr.mxu0 %v748
        %1464 = vmatpush1.msra.mxu0 %v747
        %1465 = vmatprep.subr.mxu0 %v744
        %1466 = vmatpush1.msra.mxu0 %v743
        %1467 = vmatprep.subr.mxu0 %v740
        %1468 = vmatpush1.msra.mxu0 %v739
        %1469 = vmatprep.subr.mxu0 %v736
        %1470 = vmatpush1.msra.mxu0 %v735
        %1471 = vmatprep.subr.mxu0 %v732
        %1472 = vmatpush1.msra.mxu0 %v731
        %1473 = vmatprep.subr.mxu0 %v728
        %1474 = vmatpush1.msra.mxu0 %v727
        %1475 = vmatprep.subr.mxu0 %v724
        %1476 = vmatpush1.msra.mxu0 %v723
        %1477 = vmatprep.subr.mxu0 %v720
        %1478 = vmatpush1.msra.mxu0 %v719
        %1479 = vmatprep.subr.mxu0 %v716
        %1480 = vmatpush1.msra.mxu0 %v715
        %1481 = vmatprep.subr.mxu0 %v712
        %1482 = vmatpush1.msra.mxu0 %v711
        %1483 = vmatprep.subr.mxu0 %v708
        %1484 = vmatpush1.msra.mxu0 %v707
        %1485 = vmatprep.subr.mxu0 0.0
        %1486 = vmatpush2.msra.mxu0 0.0
        %1487 = vmatprep.subr.mxu0 0.0
        %1488 = vmatpush2.msra.mxu0 0.0
        %1489 = vmatprep.subr.mxu0 0.0
        %1490 = vmatpush2.msra.mxu0 0.0
        %1491 = vmatprep.subr.mxu0 0.0
        %1492 = vmatpush2.msra.mxu0 0.0
        %1493 = vmatprep.subr.mxu0 0.0
        %1494 = vmatpush2.msra.mxu0 0.0
        %1495 = vmatprep.subr.mxu0 0.0
        %1496 = vmatpush2.msra.mxu0 0.0
        %1497 = vmatprep.subr.mxu0 0.0
        %1498 = vmatpush2.msra.mxu0 0.0
        %1499 = vmatprep.subr.mxu0 0.0
        %1500 = vmatpush2.msra.mxu0 0.0
        %1501 = vmatprep.subr.mxu0 0.0
        %1502 = vmatpush2.msra.mxu0 0.0
        %1503 = vmatprep.subr.mxu0 0.0
        %1504 = vmatpush2.msra.mxu0 0.0
        %1505 = vmatprep.subr.mxu0 0.0
        %1506 = vmatpush2.msra.mxu0 0.0
        %1507 = vmatprep.subr.mxu0 0.0
        %1508 = vmatpush2.msra.mxu0 0.0
        %1509 = vmatprep.subr.mxu0 0.0
        %1510 = vmatpush2.msra.mxu0 0.0
        %1511 = vmatprep.subr.mxu0 0.0
        %1512 = vmatpush2.msra.mxu0 0.0
        %1513 = vmatprep.subr.mxu0 0.0
        %1514 = vmatpush2.msra.mxu0 0.0
        %1515 = vmatprep.subr.mxu0 0.0
        %1516 = vmatpush2.msra.mxu0 0.0
        %1517 = vmatprep.mubr.f32.mxu0 0.0
        %1518 = vmatmul.mubr.f32.gmra.mxu0 %v1452
        %v1519 = vpop.f32.mrf.mxu0
        %v1520 = vadd.f32 0.0, %v1519
        %v1521 = vpop.f32.mrf.mxu0
        %v1522 = vadd.f32 0.0, %v1521
        %1523 = vdwg.mxu0
        %1524 = vmatprep.subr.mxu0 %v770
        %1525 = vmatpush1.msra.mxu0 %v769
        %1526 = vmatprep.subr.mxu0 %v766
        %1527 = vmatpush1.msra.mxu0 %v765
        %1528 = vmatprep.subr.mxu0 %v762
        %1529 = vmatpush1.msra.mxu0 %v761
        %1530 = vmatprep.subr.mxu0 %v758
        %1531 = vmatpush1.msra.mxu0 %v757
        %1532 = vmatprep.subr.mxu0 %v754
        %1533 = vmatpush1.msra.mxu0 %v753
        %1534 = vmatprep.subr.mxu0 %v750
        %1535 = vmatpush1.msra.mxu0 %v749
        %1536 = vmatprep.subr.mxu0 %v746
        %1537 = vmatpush1.msra.mxu0 %v745
        %1538 = vmatprep.subr.mxu0 %v742
        %1539 = vmatpush1.msra.mxu0 %v741
        %1540 = vmatprep.subr.mxu0 %v738
        %1541 = vmatpush1.msra.mxu0 %v737
        %1542 = vmatprep.subr.mxu0 %v734
        %1543 = vmatpush1.msra.mxu0 %v733
        %1544 = vmatprep.subr.mxu0 %v730
        %1545 = vmatpush1.msra.mxu0 %v729
        %1546 = vmatprep.subr.mxu0 %v726
        %1547 = vmatpush1.msra.mxu0 %v725
        %1548 = vmatprep.subr.mxu0 %v722
        %1549 = vmatpush1.msra.mxu0 %v721
        %1550 = vmatprep.subr.mxu0 %v718
        %1551 = vmatpush1.msra.mxu0 %v717
        %1552 = vmatprep.subr.mxu0 %v714
        %1553 = vmatpush1.msra.mxu0 %v713
        %1554 = vmatprep.subr.mxu0 %v710
        %1555 = vmatpush1.msra.mxu0 %v709
        %1556 = vmatprep.subr.mxu0 0.0
        %1557 = vmatpush2.msra.mxu0 0.0
        %1558 = vmatprep.subr.mxu0 0.0
        %1559 = vmatpush2.msra.mxu0 0.0
        %1560 = vmatprep.subr.mxu0 0.0
        %1561 = vmatpush2.msra.mxu0 0.0
        %1562 = vmatprep.subr.mxu0 0.0
        %1563 = vmatpush2.msra.mxu0 0.0
        %1564 = vmatprep.subr.mxu0 0.0
        %1565 = vmatpush2.msra.mxu0 0.0
        %1566 = vmatprep.subr.mxu0 0.0
        %1567 = vmatpush2.msra.mxu0 0.0
        %1568 = vmatprep.subr.mxu0 0.0
        %1569 = vmatpush2.msra.mxu0 0.0
        %1570 = vmatprep.subr.mxu0 0.0
        %1571 = vmatpush2.msra.mxu0 0.0
        %1572 = vmatprep.subr.mxu0 0.0
        %1573 = vmatpush2.msra.mxu0 0.0
        %1574 = vmatprep.subr.mxu0 0.0
        %1575 = vmatpush2.msra.mxu0 0.0
        %1576 = vmatprep.subr.mxu0 0.0
        %1577 = vmatpush2.msra.mxu0 0.0
        %1578 = vmatprep.subr.mxu0 0.0
        %1579 = vmatpush2.msra.mxu0 0.0
        %1580 = vmatprep.subr.mxu0 0.0
        %1581 = vmatpush2.msra.mxu0 0.0
        %1582 = vmatprep.subr.mxu0 0.0
        %1583 = vmatpush2.msra.mxu0 0.0
        %1584 = vmatprep.subr.mxu0 0.0
        %1585 = vmatpush2.msra.mxu0 0.0
        %1586 = vmatprep.subr.mxu0 0.0
        %1587 = vmatpush2.msra.mxu0 0.0
        %1588 = vmatprep.mubr.f32.mxu0 0.0
        %1589 = vmatmul.mubr.f32.gmra.mxu0 %v1452
        %v1590 = vpop.f32.mrf.mxu0
        %v1591 = vadd.f32 0.0, %v1590
        %v1592 = vpop.f32.mrf.mxu0
        %v1593 = vadd.f32 0.0, %v1592
        %1594 = vdwg.mxu0
        %v1595 = vadd.f32 %v572, %v1520
        %v1596 = vadd.f32 %v574, %v1522
        %v1597 = vadd.f32 %v685, %v1591
        %v1598 = vadd.f32 %v687, %v1593
        %v1599 = vxor.u32 %v1595, 2147483648
        %v1600 = vmul.f32 %v1599, 1.442695
        %v1601 = vpow.pop %v1600
        %v1602 = vadd.f32 %v1601, 1.0
        %v1603 = vrcp.pop %v1602
        %v1604 = vmul.f32 1.0, %v1603
        %v1605 = vxor.u32 %v1596, 2147483648
        %v1606 = vmul.f32 %v1605, 1.442695
        %v1607 = vpow.pop %v1606
        %v1608 = vadd.f32 %v1607, 1.0
        %v1609 = vrcp.pop %v1608
        %v1610 = vmul.f32 1.0, %v1609
        %v1611 = vtanh.pop %v1597
        %v1612 = vxor.u32 %v1598, 2147483648
        %v1613 = vmul.f32 %v1612, 1.442695
        %v1614 = vpow.pop %v1613
        %v1615 = vadd.f32 %v1614, 1.0
        %v1616 = vrcp.pop %v1615
        %v1617 = vmul.f32 1.0, %v1616
        %v1618 = vmul.f32 %v1610, %v1450
        %v1619 = vmul.f32 %v1604, %v1611
        %v1620 = vadd.f32 %v1618, %v1619
        %v1621 = vtanh.pop %v1620
        %v1622 = vmul.f32 %v1617, %v1621
        %1623 = vmatprep.subr.mxu0 %v768
        %1624 = vmatpush1.msra.mxu0 %v767
        %1625 = vmatprep.subr.mxu0 %v764
        %1626 = vmatpush1.msra.mxu0 %v763
        %1627 = vmatprep.subr.mxu0 %v760
        %1628 = vmatpush1.msra.mxu0 %v759
        %1629 = vmatprep.subr.mxu0 %v756
        %1630 = vmatpush1.msra.mxu0 %v755
        %1631 = vmatprep.subr.mxu0 %v752
        %1632 = vmatpush1.msra.mxu0 %v751
        %1633 = vmatprep.subr.mxu0 %v748
        %1634 = vmatpush1.msra.mxu0 %v747
        %1635 = vmatprep.subr.mxu0 %v744
        %1636 = vmatpush1.msra.mxu0 %v743
        %1637 = vmatprep.subr.mxu0 %v740
        %1638 = vmatpush1.msra.mxu0 %v739
        %1639 = vmatprep.subr.mxu0 %v736
        %1640 = vmatpush1.msra.mxu0 %v735
        %1641 = vmatprep.subr.mxu0 %v732
        %1642 = vmatpush1.msra.mxu0 %v731
        %1643 = vmatprep.subr.mxu0 %v728
        %1644 = vmatpush1.msra.mxu0 %v727
        %1645 = vmatprep.subr.mxu0 %v724
        %1646 = vmatpush1.msra.mxu0 %v723
        %1647 = vmatprep.subr.mxu0 %v720
        %1648 = vmatpush1.msra.mxu0 %v719
        %1649 = vmatprep.subr.mxu0 %v716
        %1650 = vmatpush1.msra.mxu0 %v715
        %1651 = vmatprep.subr.mxu0 %v712
        %1652 = vmatpush1.msra.mxu0 %v711
        %1653 = vmatprep.subr.mxu0 %v708
        %1654 = vmatpush1.msra.mxu0 %v707
        %1655 = vmatprep.subr.mxu0 0.0
        %1656 = vmatpush2.msra.mxu0 0.0
        %1657 = vmatprep.subr.mxu0 0.0
        %1658 = vmatpush2.msra.mxu0 0.0
        %1659 = vmatprep.subr.mxu0 0.0
        %1660 = vmatpush2.msra.mxu0 0.0
        %1661 = vmatprep.subr.mxu0 0.0
        %1662 = vmatpush2.msra.mxu0 0.0
        %1663 = vmatprep.subr.mxu0 0.0
        %1664 = vmatpush2.msra.mxu0 0.0
        %1665 = vmatprep.subr.mxu0 0.0
        %1666 = vmatpush2.msra.mxu0 0.0
        %1667 = vmatprep.subr.mxu0 0.0
        %1668 = vmatpush2.msra.mxu0 0.0
        %1669 = vmatprep.subr.mxu0 0.0
        %1670 = vmatpush2.msra.mxu0 0.0
        %1671 = vmatprep.subr.mxu0 0.0
        %1672 = vmatpush2.msra.mxu0 0.0
        %1673 = vmatprep.subr.mxu0 0.0
        %1674 = vmatpush2.msra.mxu0 0.0
        %1675 = vmatprep.subr.mxu0 0.0
        %1676 = vmatpush2.msra.mxu0 0.0
        %1677 = vmatprep.subr.mxu0 0.0
        %1678 = vmatpush2.msra.mxu0 0.0
        %1679 = vmatprep.subr.mxu0 0.0
        %1680 = vmatpush2.msra.mxu0 0.0
        %1681 = vmatprep.subr.mxu0 0.0
        %1682 = vmatpush2.msra.mxu0 0.0
        %1683 = vmatprep.subr.mxu0 0.0
        %1684 = vmatpush2.msra.mxu0 0.0
        %1685 = vmatprep.subr.mxu0 0.0
        %1686 = vmatpush2.msra.mxu0 0.0
        %1687 = vmatprep.mubr.f32.mxu0 0.0
        %1688 = vmatmul.mubr.f32.gmra.mxu0 %v1622
        %v1689 = vpop.f32.mrf.mxu0
        %v1690 = vadd.f32 0.0, %v1689
        %v1691 = vpop.f32.mrf.mxu0
        %v1692 = vadd.f32 0.0, %v1691
        %1693 = vdwg.mxu0
        %1694 = vmatprep.subr.mxu0 %v770
        %1695 = vmatpush1.msra.mxu0 %v769
        %1696 = vmatprep.subr.mxu0 %v766
        %1697 = vmatpush1.msra.mxu0 %v765
        %1698 = vmatprep.subr.mxu0 %v762
        %1699 = vmatpush1.msra.mxu0 %v761
        %1700 = vmatprep.subr.mxu0 %v758
        %1701 = vmatpush1.msra.mxu0 %v757
        %1702 = vmatprep.subr.mxu0 %v754
        %1703 = vmatpush1.msra.mxu0 %v753
        %1704 = vmatprep.subr.mxu0 %v750
        %1705 = vmatpush1.msra.mxu0 %v749
        %1706 = vmatprep.subr.mxu0 %v746
        %1707 = vmatpush1.msra.mxu0 %v745
        %1708 = vmatprep.subr.mxu0 %v742
        %1709 = vmatpush1.msra.mxu0 %v741
        %1710 = vmatprep.subr.mxu0 %v738
        %1711 = vmatpush1.msra.mxu0 %v737
        %1712 = vmatprep.subr.mxu0 %v734
        %1713 = vmatpush1.msra.mxu0 %v733
        %1714 = vmatprep.subr.mxu0 %v730
        %1715 = vmatpush1.msra.mxu0 %v729
        %1716 = vmatprep.subr.mxu0 %v726
        %1717 = vmatpush1.msra.mxu0 %v725
        %1718 = vmatprep.subr.mxu0 %v722
        %1719 = vmatpush1.msra.mxu0 %v721
        %1720 = vmatprep.subr.mxu0 %v718
        %1721 = vmatpush1.msra.mxu0 %v717
        %1722 = vmatprep.subr.mxu0 %v714
        %1723 = vmatpush1.msra.mxu0 %v713
        %1724 = vmatprep.subr.mxu0 %v710
        %1725 = vmatpush1.msra.mxu0 %v709
        %1726 = vmatprep.subr.mxu0 0.0
        %1727 = vmatpush2.msra.mxu0 0.0
        %1728 = vmatprep.subr.mxu0 0.0
        %1729 = vmatpush2.msra.mxu0 0.0
        %1730 = vmatprep.subr.mxu0 0.0
        %1731 = vmatpush2.msra.mxu0 0.0
        %1732 = vmatprep.subr.mxu0 0.0
        %1733 = vmatpush2.msra.mxu0 0.0
        %1734 = vmatprep.subr.mxu0 0.0
        %1735 = vmatpush2.msra.mxu0 0.0
        %1736 = vmatprep.subr.mxu0 0.0
        %1737 = vmatpush2.msra.mxu0 0.0
        %1738 = vmatprep.subr.mxu0 0.0
        %1739 = vmatpush2.msra.mxu0 0.0
        %1740 = vmatprep.subr.mxu0 0.0
        %1741 = vmatpush2.msra.mxu0 0.0
        %1742 = vmatprep.subr.mxu0 0.0
        %1743 = vmatpush2.msra.mxu0 0.0
        %1744 = vmatprep.subr.mxu0 0.0
        %1745 = vmatpush2.msra.mxu0 0.0
        %1746 = vmatprep.subr.mxu0 0.0
        %1747 = vmatpush2.msra.mxu0 0.0
        %1748 = vmatprep.subr.mxu0 0.0
        %1749 = vmatpush2.msra.mxu0 0.0
        %1750 = vmatprep.subr.mxu0 0.0
        %1751 = vmatpush2.msra.mxu0 0.0
        %1752 = vmatprep.subr.mxu0 0.0
        %1753 = vmatpush2.msra.mxu0 0.0
        %1754 = vmatprep.subr.mxu0 0.0
        %1755 = vmatpush2.msra.mxu0 0.0
        %1756 = vmatprep.subr.mxu0 0.0
        %1757 = vmatpush2.msra.mxu0 0.0
        %1758 = vmatprep.mubr.f32.mxu0 0.0
        %1759 = vmatmul.mubr.f32.gmra.mxu0 %v1622
        %v1760 = vpop.f32.mrf.mxu0
        %v1761 = vadd.f32 0.0, %v1760
        %v1762 = vpop.f32.mrf.mxu0
        %v1763 = vadd.f32 0.0, %v1762
        %1764 = vdwg.mxu0
        %v1765 = vadd.f32 %v578, %v1690
        %v1766 = vadd.f32 %v580, %v1692
        %v1767 = vadd.f32 %v691, %v1761
        %v1768 = vadd.f32 %v693, %v1763
        %v1769 = vxor.u32 %v1765, 2147483648
        %v1770 = vmul.f32 %v1769, 1.442695
        %v1771 = vpow.pop %v1770
        %v1772 = vadd.f32 %v1771, 1.0
        %v1773 = vrcp.pop %v1772
        %v1774 = vmul.f32 1.0, %v1773
        %v1775 = vxor.u32 %v1766, 2147483648
        %v1776 = vmul.f32 %v1775, 1.442695
        %v1777 = vpow.pop %v1776
        %v1778 = vadd.f32 %v1777, 1.0
        %v1779 = vrcp.pop %v1778
        %v1780 = vmul.f32 1.0, %v1779
        %v1781 = vtanh.pop %v1767
        %v1782 = vxor.u32 %v1768, 2147483648
        %v1783 = vmul.f32 %v1782, 1.442695
        %v1784 = vpow.pop %v1783
        %v1785 = vadd.f32 %v1784, 1.0
        %v1786 = vrcp.pop %v1785
        %v1787 = vmul.f32 1.0, %v1786
        %v1788 = vmul.f32 %v1780, %v1620
        %v1789 = vmul.f32 %v1774, %v1781
        %v1790 = vadd.f32 %v1788, %v1789
        %v1791 = vtanh.pop %v1790
        %v1792 = vmul.f32 %v1787, %v1791
        %1793 = vmatprep.subr.mxu0 %v768
        %1794 = vmatpush1.msra.mxu0 %v767
        %1795 = vmatprep.subr.mxu0 %v764
        %1796 = vmatpush1.msra.mxu0 %v763
        %1797 = vmatprep.subr.mxu0 %v760
        %1798 = vmatpush1.msra.mxu0 %v759
        %1799 = vmatprep.subr.mxu0 %v756
        %1800 = vmatpush1.msra.mxu0 %v755
        %1801 = vmatprep.subr.mxu0 %v752
        %1802 = vmatpush1.msra.mxu0 %v751
        %1803 = vmatprep.subr.mxu0 %v748
        %1804 = vmatpush1.msra.mxu0 %v747
        %1805 = vmatprep.subr.mxu0 %v744
        %1806 = vmatpush1.msra.mxu0 %v743
        %1807 = vmatprep.subr.mxu0 %v740
        %1808 = vmatpush1.msra.mxu0 %v739
        %1809 = vmatprep.subr.mxu0 %v736
        %1810 = vmatpush1.msra.mxu0 %v735
        %1811 = vmatprep.subr.mxu0 %v732
        %1812 = vmatpush1.msra.mxu0 %v731
        %1813 = vmatprep.subr.mxu0 %v728
        %1814 = vmatpush1.msra.mxu0 %v727
        %1815 = vmatprep.subr.mxu0 %v724
        %1816 = vmatpush1.msra.mxu0 %v723
        %1817 = vmatprep.subr.mxu0 %v720
        %1818 = vmatpush1.msra.mxu0 %v719
        %1819 = vmatprep.subr.mxu0 %v716
        %1820 = vmatpush1.msra.mxu0 %v715
        %1821 = vmatprep.subr.mxu0 %v712
        %1822 = vmatpush1.msra.mxu0 %v711
        %1823 = vmatprep.subr.mxu0 %v708
        %1824 = vmatpush1.msra.mxu0 %v707
        %1825 = vmatprep.subr.mxu0 0.0
        %1826 = vmatpush2.msra.mxu0 0.0
        %1827 = vmatprep.subr.mxu0 0.0
        %1828 = vmatpush2.msra.mxu0 0.0
        %1829 = vmatprep.subr.mxu0 0.0
        %1830 = vmatpush2.msra.mxu0 0.0
        %1831 = vmatprep.subr.mxu0 0.0
        %1832 = vmatpush2.msra.mxu0 0.0
        %1833 = vmatprep.subr.mxu0 0.0
        %1834 = vmatpush2.msra.mxu0 0.0
        %1835 = vmatprep.subr.mxu0 0.0
        %1836 = vmatpush2.msra.mxu0 0.0
        %1837 = vmatprep.subr.mxu0 0.0
        %1838 = vmatpush2.msra.mxu0 0.0
        %1839 = vmatprep.subr.mxu0 0.0
        %1840 = vmatpush2.msra.mxu0 0.0
        %1841 = vmatprep.subr.mxu0 0.0
        %1842 = vmatpush2.msra.mxu0 0.0
        %1843 = vmatprep.subr.mxu0 0.0
        %1844 = vmatpush2.msra.mxu0 0.0
        %1845 = vmatprep.subr.mxu0 0.0
        %1846 = vmatpush2.msra.mxu0 0.0
        %1847 = vmatprep.subr.mxu0 0.0
        %1848 = vmatpush2.msra.mxu0 0.0
        %1849 = vmatprep.subr.mxu0 0.0
        %1850 = vmatpush2.msra.mxu0 0.0
        %1851 = vmatprep.subr.mxu0 0.0
        %1852 = vmatpush2.msra.mxu0 0.0
        %1853 = vmatprep.subr.mxu0 0.0
        %1854 = vmatpush2.msra.mxu0 0.0
        %1855 = vmatprep.subr.mxu0 0.0
        %1856 = vmatpush2.msra.mxu0 0.0
        %1857 = vmatprep.mubr.f32.mxu0 0.0
        %1858 = vmatmul.mubr.f32.gmra.mxu0 %v1792
        %v1859 = vpop.f32.mrf.mxu0
        %v1860 = vadd.f32 0.0, %v1859
        %v1861 = vpop.f32.mrf.mxu0
        %v1862 = vadd.f32 0.0, %v1861
        %1863 = vdwg.mxu0
        %1864 = vmatprep.subr.mxu0 %v770
        %1865 = vmatpush1.msra.mxu0 %v769
        %1866 = vmatprep.subr.mxu0 %v766
        %1867 = vmatpush1.msra.mxu0 %v765
        %1868 = vmatprep.subr.mxu0 %v762
        %1869 = vmatpush1.msra.mxu0 %v761
        %1870 = vmatprep.subr.mxu0 %v758
        %1871 = vmatpush1.msra.mxu0 %v757
        %1872 = vmatprep.subr.mxu0 %v754
        %1873 = vmatpush1.msra.mxu0 %v753
        %1874 = vmatprep.subr.mxu0 %v750
        %1875 = vmatpush1.msra.mxu0 %v749
        %1876 = vmatprep.subr.mxu0 %v746
        %1877 = vmatpush1.msra.mxu0 %v745
        %1878 = vmatprep.subr.mxu0 %v742
        %1879 = vmatpush1.msra.mxu0 %v741
        %1880 = vmatprep.subr.mxu0 %v738
        %1881 = vmatpush1.msra.mxu0 %v737
        %1882 = vmatprep.subr.mxu0 %v734
        %1883 = vmatpush1.msra.mxu0 %v733
        %1884 = vmatprep.subr.mxu0 %v730
        %1885 = vmatpush1.msra.mxu0 %v729
        %1886 = vmatprep.subr.mxu0 %v726
        %1887 = vmatpush1.msra.mxu0 %v725
        %1888 = vmatprep.subr.mxu0 %v722
        %1889 = vmatpush1.msra.mxu0 %v721
        %1890 = vmatprep.subr.mxu0 %v718
        %1891 = vmatpush1.msra.mxu0 %v717
        %1892 = vmatprep.subr.mxu0 %v714
        %1893 = vmatpush1.msra.mxu0 %v713
        %1894 = vmatprep.subr.mxu0 %v710
        %1895 = vmatpush1.msra.mxu0 %v709
        %1896 = vmatprep.subr.mxu0 0.0
        %1897 = vmatpush2.msra.mxu0 0.0
        %1898 = vmatprep.subr.mxu0 0.0
        %1899 = vmatpush2.msra.mxu0 0.0
        %1900 = vmatprep.subr.mxu0 0.0
        %1901 = vmatpush2.msra.mxu0 0.0
        %1902 = vmatprep.subr.mxu0 0.0
        %1903 = vmatpush2.msra.mxu0 0.0
        %1904 = vmatprep.subr.mxu0 0.0
        %1905 = vmatpush2.msra.mxu0 0.0
        %1906 = vmatprep.subr.mxu0 0.0
        %1907 = vmatpush2.msra.mxu0 0.0
        %1908 = vmatprep.subr.mxu0 0.0
        %1909 = vmatpush2.msra.mxu0 0.0
        %1910 = vmatprep.subr.mxu0 0.0
        %1911 = vmatpush2.msra.mxu0 0.0
        %1912 = vmatprep.subr.mxu0 0.0
        %1913 = vmatpush2.msra.mxu0 0.0
        %1914 = vmatprep.subr.mxu0 0.0
        %1915 = vmatpush2.msra.mxu0 0.0
        %1916 = vmatprep.subr.mxu0 0.0
        %1917 = vmatpush2.msra.mxu0 0.0
        %1918 = vmatprep.subr.mxu0 0.0
        %1919 = vmatpush2.msra.mxu0 0.0
        %1920 = vmatprep.subr.mxu0 0.0
        %1921 = vmatpush2.msra.mxu0 0.0
        %1922 = vmatprep.subr.mxu0 0.0
        %1923 = vmatpush2.msra.mxu0 0.0
        %1924 = vmatprep.subr.mxu0 0.0
        %1925 = vmatpush2.msra.mxu0 0.0
        %1926 = vmatprep.subr.mxu0 0.0
        %1927 = vmatpush2.msra.mxu0 0.0
        %1928 = vmatprep.mubr.f32.mxu0 0.0
        %1929 = vmatmul.mubr.f32.gmra.mxu0 %v1792
        %v1930 = vpop.f32.mrf.mxu0
        %v1931 = vadd.f32 0.0, %v1930
        %v1932 = vpop.f32.mrf.mxu0
        %v1933 = vadd.f32 0.0, %v1932
        %1934 = vdwg.mxu0
        %v1935 = vadd.f32 %v584, %v1860
        %v1936 = vadd.f32 %v586, %v1862
        %v1937 = vadd.f32 %v697, %v1931
        %v1938 = vadd.f32 %v699, %v1933
        %v1939 = vxor.u32 %v1935, 2147483648
        %v1940 = vmul.f32 %v1939, 1.442695
        %v1941 = vpow.pop %v1940
        %v1942 = vadd.f32 %v1941, 1.0
        %v1943 = vrcp.pop %v1942
        %v1944 = vmul.f32 1.0, %v1943
        %v1945 = vxor.u32 %v1936, 2147483648
        %v1946 = vmul.f32 %v1945, 1.442695
        %v1947 = vpow.pop %v1946
        %v1948 = vadd.f32 %v1947, 1.0
        %v1949 = vrcp.pop %v1948
        %v1950 = vmul.f32 1.0, %v1949
        %v1951 = vtanh.pop %v1937
        %v1952 = vxor.u32 %v1938, 2147483648
        %v1953 = vmul.f32 %v1952, 1.442695
        %v1954 = vpow.pop %v1953
        %v1955 = vadd.f32 %v1954, 1.0
        %v1956 = vrcp.pop %v1955
        %v1957 = vmul.f32 1.0, %v1956
        %v1958 = vmul.f32 %v1950, %v1790
        %v1959 = vmul.f32 %v1944, %v1951
        %v1960 = vadd.f32 %v1958, %v1959
        %v1961 = vtanh.pop %v1960
        %v1962 = vmul.f32 %v1957, %v1961
        %1963 = vmatprep.subr.mxu0 %v768
        %1964 = vmatpush1.msra.mxu0 %v767
        %1965 = vmatprep.subr.mxu0 %v764
        %1966 = vmatpush1.msra.mxu0 %v763
        %1967 = vmatprep.subr.mxu0 %v760
        %1968 = vmatpush1.msra.mxu0 %v759
        %1969 = vmatprep.subr.mxu0 %v756
        %1970 = vmatpush1.msra.mxu0 %v755
        %1971 = vmatprep.subr.mxu0 %v752
        %1972 = vmatpush1.msra.mxu0 %v751
        %1973 = vmatprep.subr.mxu0 %v748
        %1974 = vmatpush1.msra.mxu0 %v747
        %1975 = vmatprep.subr.mxu0 %v744
        %1976 = vmatpush1.msra.mxu0 %v743
        %1977 = vmatprep.subr.mxu0 %v740
        %1978 = vmatpush1.msra.mxu0 %v739
        %1979 = vmatprep.subr.mxu0 %v736
        %1980 = vmatpush1.msra.mxu0 %v735
        %1981 = vmatprep.subr.mxu0 %v732
        %1982 = vmatpush1.msra.mxu0 %v731
        %1983 = vmatprep.subr.mxu0 %v728
        %1984 = vmatpush1.msra.mxu0 %v727
        %1985 = vmatprep.subr.mxu0 %v724
        %1986 = vmatpush1.msra.mxu0 %v723
        %1987 = vmatprep.subr.mxu0 %v720
        %1988 = vmatpush1.msra.mxu0 %v719
        %1989 = vmatprep.subr.mxu0 %v716
        %1990 = vmatpush1.msra.mxu0 %v715
        %1991 = vmatprep.subr.mxu0 %v712
        %1992 = vmatpush1.msra.mxu0 %v711
        %1993 = vmatprep.subr.mxu0 %v708
        %1994 = vmatpush1.msra.mxu0 %v707
        %1995 = vmatprep.subr.mxu0 0.0
        %1996 = vmatpush2.msra.mxu0 0.0
        %1997 = vmatprep.subr.mxu0 0.0
        %1998 = vmatpush2.msra.mxu0 0.0
        %1999 = vmatprep.subr.mxu0 0.0
        %2000 = vmatpush2.msra.mxu0 0.0
        %2001 = vmatprep.subr.mxu0 0.0
        %2002 = vmatpush2.msra.mxu0 0.0
        %2003 = vmatprep.subr.mxu0 0.0
        %2004 = vmatpush2.msra.mxu0 0.0
        %2005 = vmatprep.subr.mxu0 0.0
        %2006 = vmatpush2.msra.mxu0 0.0
        %2007 = vmatprep.subr.mxu0 0.0
        %2008 = vmatpush2.msra.mxu0 0.0
        %2009 = vmatprep.subr.mxu0 0.0
        %2010 = vmatpush2.msra.mxu0 0.0
        %2011 = vmatprep.subr.mxu0 0.0
        %2012 = vmatpush2.msra.mxu0 0.0
        %2013 = vmatprep.subr.mxu0 0.0
        %2014 = vmatpush2.msra.mxu0 0.0
        %2015 = vmatprep.subr.mxu0 0.0
        %2016 = vmatpush2.msra.mxu0 0.0
        %2017 = vmatprep.subr.mxu0 0.0
        %2018 = vmatpush2.msra.mxu0 0.0
        %2019 = vmatprep.subr.mxu0 0.0
        %2020 = vmatpush2.msra.mxu0 0.0
        %2021 = vmatprep.subr.mxu0 0.0
        %2022 = vmatpush2.msra.mxu0 0.0
        %2023 = vmatprep.subr.mxu0 0.0
        %2024 = vmatpush2.msra.mxu0 0.0
        %2025 = vmatprep.subr.mxu0 0.0
        %2026 = vmatpush2.msra.mxu0 0.0
        %2027 = vmatprep.mubr.f32.mxu0 0.0
        %2028 = vmatmul.mubr.f32.gmra.mxu0 %v1962
        %v2029 = vpop.f32.mrf.mxu0
        %v2030 = vadd.f32 0.0, %v2029
        %v2031 = vpop.f32.mrf.mxu0
        %v2032 = vadd.f32 0.0, %v2031
        %2033 = vdwg.mxu0
        %2034 = vmatprep.subr.mxu0 %v770
        %2035 = vmatpush1.msra.mxu0 %v769
        %2036 = vmatprep.subr.mxu0 %v766
        %2037 = vmatpush1.msra.mxu0 %v765
        %2038 = vmatprep.subr.mxu0 %v762
        %2039 = vmatpush1.msra.mxu0 %v761
        %2040 = vmatprep.subr.mxu0 %v758
        %2041 = vmatpush1.msra.mxu0 %v757
        %2042 = vmatprep.subr.mxu0 %v754
        %2043 = vmatpush1.msra.mxu0 %v753
        %2044 = vmatprep.subr.mxu0 %v750
        %2045 = vmatpush1.msra.mxu0 %v749
        %2046 = vmatprep.subr.mxu0 %v746
        %2047 = vmatpush1.msra.mxu0 %v745
        %2048 = vmatprep.subr.mxu0 %v742
        %2049 = vmatpush1.msra.mxu0 %v741
        %2050 = vmatprep.subr.mxu0 %v738
        %2051 = vmatpush1.msra.mxu0 %v737
        %2052 = vmatprep.subr.mxu0 %v734
        %2053 = vmatpush1.msra.mxu0 %v733
        %2054 = vmatprep.subr.mxu0 %v730
        %2055 = vmatpush1.msra.mxu0 %v729
        %2056 = vmatprep.subr.mxu0 %v726
        %2057 = vmatpush1.msra.mxu0 %v725
        %2058 = vmatprep.subr.mxu0 %v722
        %2059 = vmatpush1.msra.mxu0 %v721
        %2060 = vmatprep.subr.mxu0 %v718
        %2061 = vmatpush1.msra.mxu0 %v717
        %2062 = vmatprep.subr.mxu0 %v714
        %2063 = vmatpush1.msra.mxu0 %v713
        %2064 = vmatprep.subr.mxu0 %v710
        %2065 = vmatpush1.msra.mxu0 %v709
        %2066 = vmatprep.subr.mxu0 0.0
        %2067 = vmatpush2.msra.mxu0 0.0
        %2068 = vmatprep.subr.mxu0 0.0
        %2069 = vmatpush2.msra.mxu0 0.0
        %2070 = vmatprep.subr.mxu0 0.0
        %2071 = vmatpush2.msra.mxu0 0.0
        %2072 = vmatprep.subr.mxu0 0.0
        %2073 = vmatpush2.msra.mxu0 0.0
        %2074 = vmatprep.subr.mxu0 0.0
        %2075 = vmatpush2.msra.mxu0 0.0
        %2076 = vmatprep.subr.mxu0 0.0
        %2077 = vmatpush2.msra.mxu0 0.0
        %2078 = vmatprep.subr.mxu0 0.0
        %2079 = vmatpush2.msra.mxu0 0.0
        %2080 = vmatprep.subr.mxu0 0.0
        %2081 = vmatpush2.msra.mxu0 0.0
        %2082 = vmatprep.subr.mxu0 0.0
        %2083 = vmatpush2.msra.mxu0 0.0
        %2084 = vmatprep.subr.mxu0 0.0
        %2085 = vmatpush2.msra.mxu0 0.0
        %2086 = vmatprep.subr.mxu0 0.0
        %2087 = vmatpush2.msra.mxu0 0.0
        %2088 = vmatprep.subr.mxu0 0.0
        %2089 = vmatpush2.msra.mxu0 0.0
        %2090 = vmatprep.subr.mxu0 0.0
        %2091 = vmatpush2.msra.mxu0 0.0
        %2092 = vmatprep.subr.mxu0 0.0
        %2093 = vmatpush2.msra.mxu0 0.0
        %2094 = vmatprep.subr.mxu0 0.0
        %2095 = vmatpush2.msra.mxu0 0.0
        %2096 = vmatprep.subr.mxu0 0.0
        %2097 = vmatpush2.msra.mxu0 0.0
        %2098 = vmatprep.mubr.f32.mxu0 0.0
        %2099 = vmatmul.mubr.f32.gmra.mxu0 %v1962
        %v2100 = vpop.f32.mrf.mxu0
        %v2101 = vadd.f32 0.0, %v2100
        %v2102 = vpop.f32.mrf.mxu0
        %v2103 = vadd.f32 0.0, %v2102
        %2104 = vdwg.mxu0
        %v2105 = vadd.f32 %v590, %v2030
        %v2106 = vadd.f32 %v592, %v2032
        %v2107 = vadd.f32 %v703, %v2101
        %v2108 = vadd.f32 %v705, %v2103
        %v2109 = vxor.u32 %v2105, 2147483648
        %v2110 = vmul.f32 %v2109, 1.442695
        %v2111 = vpow.pop %v2110
        %v2112 = vadd.f32 %v2111, 1.0
        %v2113 = vrcp.pop %v2112
        %v2114 = vmul.f32 1.0, %v2113
        %v2115 = vxor.u32 %v2106, 2147483648
        %v2116 = vmul.f32 %v2115, 1.442695
        %v2117 = vpow.pop %v2116
        %v2118 = vadd.f32 %v2117, 1.0
        %v2119 = vrcp.pop %v2118
        %v2120 = vmul.f32 1.0, %v2119
        %v2121 = vtanh.pop %v2107
        %v2122 = vxor.u32 %v2108, 2147483648
        %v2123 = vmul.f32 %v2122, 1.442695
        %v2124 = vpow.pop %v2123
        %v2125 = vadd.f32 %v2124, 1.0
        %v2126 = vrcp.pop %v2125
        %v2127 = vmul.f32 1.0, %v2126
        %v2128 = vmul.f32 %v2120, %v1960
        %v2129 = vmul.f32 %v2114, %v2121
        %v2130 = vadd.f32 %v2128, %v2129
        %v2131 = vtanh.pop %v2130
        %v2132 = vmul.f32 %v2127, %v2131
        %v2133 = vld [vmem:[%s6] sm:$0xff]
        %v2134 = vld [vmem:[%s6 + $0x8] sm:$0xff]
        %v2135 = vld [vmem:[%s6 + $0x10] sm:$0xff]
        %v2136 = vld [vmem:[%s6 + $0x18] sm:$0xff]
        %v2137 = vld [vmem:[%s6 + $0x20] sm:$0xff]
        %v2138 = vld [vmem:[%s6 + $0x28] sm:$0xff]
        %v2139 = vld [vmem:[%s6 + $0x30] sm:$0xff]
        %v2140 = vld [vmem:[%s6 + $0x38] sm:$0xff]
        %v2141 = vld [vmem:[%s6 + $0x40] sm:$0xff]
        %v2142 = vld [vmem:[%s6 + $0x48] sm:$0xff]
        %v2143 = vld [vmem:[%s6 + $0x50] sm:$0xff]
        %v2144 = vld [vmem:[%s6 + $0x58] sm:$0xff]
        %v2145 = vld [vmem:[%s6 + $0x60] sm:$0xff]
        %v2146 = vld [vmem:[%s6 + $0x68] sm:$0xff]
        %v2147 = vld [vmem:[%s6 + $0x70] sm:$0xff]
        %v2148 = vld [vmem:[%s6 + $0x78] sm:$0xff]
        %v2149 = vld [vmem:[%s7] sm:$0x1]
        %v2151 = vlaneseq
        %v2152 = vshrl.u32 %v2151, 7
        %v2153 = vsub.s32 0, %v2152
        %v2154 = vrot.slane %v2149, %v2153
        %2156 = vmatprep.subr.mxu0 0.0
        %2157 = vmatpush1.msra.mxu0 %v2148
        %2158 = vmatprep.subr.mxu0 0.0
        %2159 = vmatpush1.msra.mxu0 %v2147
        %2160 = vmatprep.subr.mxu0 0.0
        %2161 = vmatpush1.msra.mxu0 %v2146
        %2162 = vmatprep.subr.mxu0 0.0
        %2163 = vmatpush1.msra.mxu0 %v2145
        %2164 = vmatprep.subr.mxu0 0.0
        %2165 = vmatpush1.msra.mxu0 %v2144
        %2166 = vmatprep.subr.mxu0 0.0
        %2167 = vmatpush1.msra.mxu0 %v2143
        %2168 = vmatprep.subr.mxu0 0.0
        %2169 = vmatpush1.msra.mxu0 %v2142
        %2170 = vmatprep.subr.mxu0 0.0
        %2171 = vmatpush1.msra.mxu0 %v2141
        %2172 = vmatprep.subr.mxu0 0.0
        %2173 = vmatpush1.msra.mxu0 %v2140
        %2174 = vmatprep.subr.mxu0 0.0
        %2175 = vmatpush1.msra.mxu0 %v2139
        %2176 = vmatprep.subr.mxu0 0.0
        %2177 = vmatpush1.msra.mxu0 %v2138
        %2178 = vmatprep.subr.mxu0 0.0
        %2179 = vmatpush1.msra.mxu0 %v2137
        %2180 = vmatprep.subr.mxu0 0.0
        %2181 = vmatpush1.msra.mxu0 %v2136
        %2182 = vmatprep.subr.mxu0 0.0
        %2183 = vmatpush1.msra.mxu0 %v2135
        %2184 = vmatprep.subr.mxu0 0.0
        %2185 = vmatpush1.msra.mxu0 %v2134
        %2186 = vmatprep.subr.mxu0 0.0
        %2187 = vmatpush1.msra.mxu0 %v2133
        %2188 = vmatprep.subr.mxu0 0.0
        %2189 = vmatpush2.msra.mxu0 0.0
        %2190 = vmatprep.subr.mxu0 0.0
        %2191 = vmatpush2.msra.mxu0 0.0
        %2192 = vmatprep.subr.mxu0 0.0
        %2193 = vmatpush2.msra.mxu0 0.0
        %2194 = vmatprep.subr.mxu0 0.0
        %2195 = vmatpush2.msra.mxu0 0.0
        %2196 = vmatprep.subr.mxu0 0.0
        %2197 = vmatpush2.msra.mxu0 0.0
        %2198 = vmatprep.subr.mxu0 0.0
        %2199 = vmatpush2.msra.mxu0 0.0
        %2200 = vmatprep.subr.mxu0 0.0
        %2201 = vmatpush2.msra.mxu0 0.0
        %2202 = vmatprep.subr.mxu0 0.0
        %2203 = vmatpush2.msra.mxu0 0.0
        %2204 = vmatprep.subr.mxu0 0.0
        %2205 = vmatpush2.msra.mxu0 0.0
        %2206 = vmatprep.subr.mxu0 0.0
        %2207 = vmatpush2.msra.mxu0 0.0
        %2208 = vmatprep.subr.mxu0 0.0
        %2209 = vmatpush2.msra.mxu0 0.0
        %2210 = vmatprep.subr.mxu0 0.0
        %2211 = vmatpush2.msra.mxu0 0.0
        %2212 = vmatprep.subr.mxu0 0.0
        %2213 = vmatpush2.msra.mxu0 0.0
        %2214 = vmatprep.subr.mxu0 0.0
        %2215 = vmatpush2.msra.mxu0 0.0
        %2216 = vmatprep.subr.mxu0 0.0
        %2217 = vmatpush2.msra.mxu0 0.0
        %2218 = vmatprep.subr.mxu0 0.0
        %2219 = vmatpush2.msra.mxu0 0.0
        %2220 = vmatprep.mubr.f32.mxu0 0.0
        %2221 = vmatmul.mubr.f32.gmra.mxu0 %v2132
        %v2222 = vpop.f32.mrf.mxu0
        %v2223 = vadd.f32 %v2154, %v2222
        %v2224 = vpop.f32.mrf.mxu0
        %2225 = vdwg.mxu0
        %v2226 = vxor.u32 %v2223, 2147483648
        %v2227 = vmul.f32 %v2226, 1.442695
        %v2228 = vpow.pop %v2227
        %v2229 = vadd.f32 %v2228, 1.0
        %v2230 = vrcp.pop %v2229
        %v2231 = vmul.f32 1.0, %v2230
        %2232 = vst [vmem:[%s417] sm:$0xff] %v2132
        %2233 = vst [vmem:[%s417 + $0x8] sm:$0xff] %v2130
        %2234 = vst [vmem:[%s417 + $0x10] sm:$0xff] %v2231
        %p2235 = scmp.lt.s32.totalorder %s20, 1
        %s2236 = scalar_select %p2235, %s20, 1
        %s2237 = smul.addr %s2236, 3
        %s2238 = smul.addr %s2237, 8
        %s2239 = scalar_lea.vmem %s8, %s2238
        // Predicated region
        $region95: #{lstm_tagger_forward_batched.1} parent=85 // pred_check
          %p2240 = pneg %p221
        $region96: #{lstm_tagger_forward_batched.1} parent=85 // pred_check_branch
          %2242 = sbr.rel (%p2240) target = $region98
        $region97: #{lstm_tagger_forward_batched.1} parent=85 // pred_region
          _
        $region98: #{lstm_tagger_forward_batched.1} parent=85 // pred_fallthru
          _
      $region86: #{lstm_tagger_forward_batched.1} parent=5 // pred_fallthru
        _
      %p2243 = scmp.le.s32.totalorder 2, %s15
      // Predicated region
      $region99: #{lstm_tagger_forward_batched.1} parent=5 // pred_check
        %p2244 = pneg %p2243
      $region100: #{lstm_tagger_forward_batched.1} parent=5 // pred_check_branch
        %2246 = sbr.rel (%p2244) target = $region102
      $region101: #{lstm_tagger_forward_batched.1} parent=5 // pred_region
        %s2247 = ssub.s32 %s15, 2
        // Predicated region
        $region103: #{lstm_tagger_forward_batched.1} parent=101 // pred_check
          %p2248 = pneg %p227
        $region104: #{lstm_tagger_forward_batched.1} parent=101 // pred_check_branch
          %2250 = sbr.rel (%p2248) target = $region106
        $region105: #{lstm_tagger_forward_batched.1} parent=101 // pred_region
          %p2251 = scmp.lt.s32.totalorder %s21, 1
          %s2252 = scalar_select %p2251, %s21, 1
          %s2253 = smul.addr %s2252, 3
          %s2254 = smul.addr %s2253, 8
          %s2255 = scalar_lea.vmem %s8, %s2254
        $region106: #{lstm_tagger_forward_batched.1} parent=101 // pred_fallthru
          _
      $region102: #{lstm_tagger_forward_batched.1} parent=5 // pred_fallthru
        _
    $region6: #{lstm_tagger_forward_batched.1} parent=1 // loop_footer
      %s19 = sadd.s32 1, %s15
    $region7: #{lstm_tagger_forward_batched.1} parent=1 // loop_footer_branch
      %14 = sbr.rel target = $region3
    $region8: #{lstm_tagger_forward_batched.1} parent=1 // loop_exit
      _
    %2256 = vsyncpa [#allocation4], 1
    %s2257 = scalar_lea.sflag [#allocation4], 1
    %2258 = vsyncpa %s2257, 1

</llo_original>
